<compile_context>
chip_gen: v7x
topology: tpu7x:2x2x1
jax: 0.10.0
libtpu: 0.0.40
codegen_flags: <defaults>
</compile_context>

<pallas_src>
import functools

import jax
import jax.numpy as jnp
import numpy as np
from jax import lax
from jax.experimental import pallas as pl
from jax.experimental.pallas import tpu as pltpu


def _sigmoid(z):
    return 1.0 / (1.0 + jnp.exp(-z))


# ----------------------------------------------------------------------------
# Fused HybridAttention kernel (one batch element per grid step)
# ----------------------------------------------------------------------------

def _hybrid_attention_kernel(x_ref, caw1t_ref, caw2t_ref, sew1t_ref, sew2t_ref,
                             tapw_ref, o_ref, pad_ref, *, W, OFF):
    C, M = x_ref.shape[1], x_ref.shape[2]
    x2 = x_ref[0]                                          # (C, M), M on lanes

    def mlp_cols(v, w1t, w2t):                             # v: (C, k) -> (C, k)
        h = jnp.maximum(jnp.dot(w1t, v, preferred_element_type=jnp.float32), 0.0)
        return jnp.dot(w2t, h, preferred_element_type=jnp.float32)

    # ---- ChannelAttention_F: sigmoid(fc2(relu(fc1(avg))) + fc2(relu(fc1(max)))) * x
    avg_c = jnp.mean(x2, axis=1, keepdims=True)            # (C, 1)  lane reduce
    max_c = jnp.max(x2, axis=1, keepdims=True)              # (C, 1)
    z = (mlp_cols(avg_c, caw1t_ref[...], caw2t_ref[...]) +
         mlp_cols(max_c, caw1t_ref[...], caw2t_ref[...]))
    ca = _sigmoid(z)                                        # (C, 1)
    x_ca = x2 * ca                                          # (C, M)

    # ---- SpatialAttention_F on x_ca: sigmoid(conv7x7([mean_c, max_c])) ----
    avg_s = jnp.mean(x_ca, axis=0, keepdims=True)           # (1, M) sublane reduce
    max_s = jnp.max(x_ca, axis=0, keepdims=True)             # (1, M)

    pad_ref[...] = jnp.zeros(pad_ref.shape, pad_ref.dtype)   # finite halo (every step)
    pad_ref[0:1, OFF:OFF + M] = avg_s
    pad_ref[1:2, OFF:OFF + M] = max_s

    acc = jnp.zeros((2, M), jnp.float32)
    for kh in range(7):
        for kw in range(7):
            t = kh * 7 + kw
            start = OFF + (kh - 3) * W + (kw - 3)
            # tapw already holds  conv_weight[c, kh, kw] * border_validity_mask.
            acc = acc + tapw_ref[t] * pad_ref[:, start:start + M]
    sa = _sigmoid(jnp.sum(acc, axis=0, keepdims=True))       # (1, M)
    x_sp = x_ca * sa                                          # (C, M)  == CBAM output

    # ---- SqueezeExcitation: x * sigmoid(fc2(relu(fc1(avgpool(x))))) ----
    avg_se = jnp.mean(x_sp, axis=1, keepdims=True)            # (C, 1)
    se = _sigmoid(mlp_cols(avg_se, sew1t_ref[...], sew2t_ref[...]))
    o_ref[0] = x_sp * se


def hybrid_attention(x, params):
    """x: (N, C, D, H, W) float32 (torch NCDHW layout)."""
    N, C, D, H, W = x.shape
    M = D * H * W
    Cr = params["ca_w1"].shape[1]
    OFF = 3 * W + 3                        # halo so every tap's lane-slice is in bounds
    MP = M + 2 * OFF

    # Host-side constants: 7x7 conv taps folded with zero-padding validity masks.
    m_idx = np.arange(M)
    h_idx = (m_idx // W) % H
    w_idx = m_idx % W
    valid = np.zeros((49, M), np.float32)
    for kh in range(7):
        for kw in range(7):
            dh, dw = kh - 3, kw - 3
            ok = ((h_idx + dh >= 0) & (h_idx + dh < H) &
                  (w_idx + dw >= 0) & (w_idx + dw < W))
            valid[kh * 7 + kw] = ok.astype(np.float32)
    sa_w = params["sa_w"].astype(jnp.float32).reshape(2, 49)              # (2, 49)
    tapw = jnp.transpose(sa_w, (1, 0))[:, :, None] * valid[:, None, :]    # (49, 2, M)

    x3 = x.reshape(N, C, M).astype(jnp.float32)     # free reshape of contiguous NCDHW
    kern = functools.partial(_hybrid_attention_kernel, W=W, OFF=OFF)

    act_spec = pl.BlockSpec((1, C, M), lambda n: (n, 0, 0))
    out = pl.pallas_call(
        kern,
        out_shape=jax.ShapeDtypeStruct((N, C, M), jnp.float32),
        grid=(N,),
        in_specs=[
            act_spec,
            pl.BlockSpec((Cr, C), lambda n: (0, 0)),      # ChannelAttention fc1^T
            pl.BlockSpec((C, Cr), lambda n: (0, 0)),      # ChannelAttention fc2^T
            pl.BlockSpec((Cr, C), lambda n: (0, 0)),      # SqueezeExcitation fc1^T
            pl.BlockSpec((C, Cr), lambda n: (0, 0)),      # SqueezeExcitation fc2^T
            pl.BlockSpec((49, 2, M), lambda n: (0, 0, 0)),  # masked conv taps
        ],
        out_specs=act_spec,
        scratch_shapes=[pltpu.VMEM((2, MP), jnp.float32)],
        compiler_params=pltpu.CompilerParams(
            dimension_semantics=("parallel",)),
    )(x3,
      params["ca_w1"].T, params["ca_w2"].T,
      params["se_w1"].T, params["se_w2"].T,
      tapw)
    return out.reshape(N, C, D, H, W)


# ----------------------------------------------------------------------------
# Pure-JAX reference for verification
# ----------------------------------------------------------------------------

def ref_forward(x, params):
    caw1, caw2 = params["ca_w1"], params["ca_w2"]
    sew1, sew2 = params["se_w1"], params["se_w2"]
    saw = params["sa_w"]                                   # (2, 7, 7)

    def mlp(v, w1, w2):                                    # v: (N, C)
        return jnp.maximum(v @ w1, 0.0) @ w2

    # Channel attention
    avg_c = jnp.mean(x, axis=(2, 3, 4))
    max_c = jnp.max(x, axis=(2, 3, 4))
    ca = _sigmoid(mlp(avg_c, caw1, caw2) + mlp(max_c, caw1, caw2))
    x_ca = x * ca[:, :, None, None, None]

    # Spatial attention
    avg_s = jnp.mean(x_ca, axis=1, keepdims=True)
    max_s = jnp.max(x_ca, axis=1, keepdims=True)
    maps = jnp.concatenate([avg_s, max_s], axis=1)         # (N, 2, D, H, W)
    w = saw.reshape(1, 2, 1, 7, 7)                         # OIDHW
    logit = lax.conv_general_dilated(
        maps, w, window_strides=(1, 1, 1),
        padding=((0, 0), (3, 3), (3, 3)),
        dimension_numbers=("NCDHW", "OIDHW", "NCDHW"))
    x_sp = x_ca * _sigmoid(logit)

    # Squeeze-Excitation
    avg_se = jnp.mean(x_sp, axis=(2, 3, 4))
    se = _sigmoid(mlp(avg_se, sew1, sew2))
    return x_sp * se[:, :, None, None, None]


# ----------------------------------------------------------------------------
# Deterministic example run
# ----------------------------------------------------------------------------

if __name__ == "__main__":
    # torch-style NCDHW input: (N, C, D, H, W) = (2, 32, 4, 8, 8), ratio=8.
    N, C, D, H, W = 2, 32, 4, 8, 8
    ratio = 8
    Cr = C // ratio

    key = jax.random.PRNGKey(0)
    kx, k1, k2, k3, k4, k5 = jax.random.split(key, 6)
    x = jax.random.normal(kx, (N, C, D, H, W), jnp.float32)
    params = dict(
        ca_w1=0.2 * jax.random.normal(k1, (C, Cr), jnp.float32),   # ChannelAttention fc1
        ca_w2=0.2 * jax.random.normal(k2, (Cr, C), jnp.float32),   # ChannelAttention fc2
        se_w1=0.2 * jax.random.normal(k3, (C, Cr), jnp.float32),   # SE fc1
        se_w2=0.2 * jax.random.normal(k4, (Cr, C), jnp.float32),   # SE fc2
        sa_w=0.2 * jax.random.normal(k5, (2, 7, 7), jnp.float32),  # SpatialAttention 7x7 conv
    )

    out = jax.jit(hybrid_attention)(x, params)
    out = jax.block_until_ready(out)

    ref = ref_forward(x, params)
    np.testing.assert_allclose(np.asarray(out), np.asarray(ref),
                               rtol=2e-3, atol=2e-3)
    print("KERNEL_OK")
</pallas_src>

<mosaic_0001>
module attributes {stable_mosaic.version = 11 : i64} {
  func.func @_hybrid_attention_kernel(%arg0: i32, %arg1: memref<1x32x256xf32, #tpu.memory_space<vmem>>, %arg2: memref<4x32xf32, #tpu.memory_space<vmem>>, %arg3: memref<32x4xf32, #tpu.memory_space<vmem>>, %arg4: memref<4x32xf32, #tpu.memory_space<vmem>>, %arg5: memref<32x4xf32, #tpu.memory_space<vmem>>, %arg6: memref<49x2x256xf32, #tpu.memory_space<vmem>>, %arg7: memref<1x32x256xf32, #tpu.memory_space<vmem>>, %arg8: memref<2x310xf32, #tpu.memory_space<vmem>>) attributes {dimension_semantics = [#tpu.dimension_semantics<parallel>], iteration_bounds = array<i64: 2>, scalar_prefetch = 0 : i64, scratch_operands = 1 : i64, tpu.core_type = #tpu.core_type<tc>, window_params = [{transform_indices = @transform_0, window_bounds = array<i64: 1, 32, 256>}, {pipeline_mode = #tpu.pipeline_mode<synchronous>, transform_indices = @transform_1, window_bounds = array<i64: 4, 32>}, {pipeline_mode = #tpu.pipeline_mode<synchronous>, transform_indices = @transform_2, window_bounds = array<i64: 32, 4>}, {pipeline_mode = #tpu.pipeline_mode<synchronous>, transform_indices = @transform_3, window_bounds = array<i64: 4, 32>}, {pipeline_mode = #tpu.pipeline_mode<synchronous>, transform_indices = @transform_4, window_bounds = array<i64: 32, 4>}, {pipeline_mode = #tpu.pipeline_mode<synchronous>, transform_indices = @transform_5, window_bounds = array<i64: 49, 2, 256>}, {transform_indices = @transform_6, window_bounds = array<i64: 1, 32, 256>}]} {
    %c0 = arith.constant 0 : index
    %c0_0 = arith.constant 0 : index
    %c0_1 = arith.constant 0 : index
    %0 = vector.load %arg1[%c0, %c0_0, %c0_1] : memref<1x32x256xf32, #tpu.memory_space<vmem>>, vector<1x32x256xf32>
    %1 = vector.shape_cast %0 : vector<1x32x256xf32> to vector<32x256xf32>
    %cst = arith.constant dense<0.000000e+00> : vector<32xf32>
    %2 = vector.multi_reduction <add>, %1, %cst [1] : vector<32x256xf32> to vector<32xf32>
    %3 = vector.shape_cast %2 : vector<32xf32> to vector<32x1xf32>
    %cst_2 = arith.constant 2.560000e+02 : f32
    %4 = vector.broadcast %cst_2 : f32 to vector<32x1xf32>
    %5 = arith.divf %3, %4 : vector<32x1xf32>
    %cst_3 = arith.constant dense<0xFF800000> : vector<32xf32>
    %6 = vector.multi_reduction <maximumf>, %1, %cst_3 [1] : vector<32x256xf32> to vector<32xf32>
    %7 = vector.shape_cast %6 : vector<32xf32> to vector<32x1xf32>
    %c0_4 = arith.constant 0 : index
    %c0_5 = arith.constant 0 : index
    %8 = vector.load %arg2[%c0_4, %c0_5] : memref<4x32xf32, #tpu.memory_space<vmem>>, vector<4x32xf32>
    %c0_6 = arith.constant 0 : index
    %c0_7 = arith.constant 0 : index
    %9 = vector.load %arg3[%c0_6, %c0_7] : memref<32x4xf32, #tpu.memory_space<vmem>>, vector<32x4xf32>
    %cst_8 = arith.constant dense<0.000000e+00> : vector<4x1xf32>
    %10 = tpu.matmul %8, %5, %cst_8 {dimension_numbers = #tpu.dot_dimension_numbers<[1], [0], [0], [1], [0, 0, 1, 1], [], []>} : vector<4x32xf32>, vector<32x1xf32>, vector<4x1xf32> -> vector<4x1xf32>
    %cst_9 = arith.constant 0.000000e+00 : f32
    %11 = vector.broadcast %cst_9 : f32 to vector<4x1xf32>
    %12 = arith.maximumf %10, %11 : vector<4x1xf32>
    %cst_10 = arith.constant dense<0.000000e+00> : vector<32x1xf32>
    %13 = tpu.matmul %9, %12, %cst_10 {dimension_numbers = #tpu.dot_dimension_numbers<[1], [0], [0], [1], [0, 0, 1, 1], [], []>} : vector<32x4xf32>, vector<4x1xf32>, vector<32x1xf32> -> vector<32x1xf32>
    %c0_11 = arith.constant 0 : index
    %c0_12 = arith.constant 0 : index
    %14 = vector.load %arg2[%c0_11, %c0_12] : memref<4x32xf32, #tpu.memory_space<vmem>>, vector<4x32xf32>
    %c0_13 = arith.constant 0 : index
    %c0_14 = arith.constant 0 : index
    %15 = vector.load %arg3[%c0_13, %c0_14] : memref<32x4xf32, #tpu.memory_space<vmem>>, vector<32x4xf32>
    %cst_15 = arith.constant dense<0.000000e+00> : vector<4x1xf32>
    %16 = tpu.matmul %14, %7, %cst_15 {dimension_numbers = #tpu.dot_dimension_numbers<[1], [0], [0], [1], [0, 0, 1, 1], [], []>} : vector<4x32xf32>, vector<32x1xf32>, vector<4x1xf32> -> vector<4x1xf32>
    %cst_16 = arith.constant 0.000000e+00 : f32
    %17 = vector.broadcast %cst_16 : f32 to vector<4x1xf32>
    %18 = arith.maximumf %16, %17 : vector<4x1xf32>
    %cst_17 = arith.constant dense<0.000000e+00> : vector<32x1xf32>
    %19 = tpu.matmul %15, %18, %cst_17 {dimension_numbers = #tpu.dot_dimension_numbers<[1], [0], [0], [1], [0, 0, 1, 1], [], []>} : vector<32x4xf32>, vector<4x1xf32>, vector<32x1xf32> -> vector<32x1xf32>
    %20 = arith.addf %13, %19 : vector<32x1xf32>
    %cst_18 = arith.constant 0.000000e+00 : f32
    %21 = vector.broadcast %cst_18 : f32 to vector<32x1xf32>
    %22 = arith.subf %21, %20 : vector<32x1xf32>
    %23 = math.exp %22 : vector<32x1xf32>
    %cst_19 = arith.constant 1.000000e+00 : f32
    %24 = vector.broadcast %cst_19 : f32 to vector<32x1xf32>
    %25 = arith.addf %24, %23 : vector<32x1xf32>
    %cst_20 = arith.constant 1.000000e+00 : f32
    %26 = vector.broadcast %cst_20 : f32 to vector<32x1xf32>
    %27 = arith.divf %26, %25 : vector<32x1xf32>
    %28 = vector.broadcast %27 : vector<32x1xf32> to vector<32x256xf32>
    %29 = arith.mulf %1, %28 : vector<32x256xf32>
    %cst_21 = arith.constant dense<0.000000e+00> : vector<256xf32>
    %30 = vector.multi_reduction <add>, %29, %cst_21 [0] : vector<32x256xf32> to vector<256xf32>
    %31 = vector.shape_cast %30 : vector<256xf32> to vector<1x256xf32>
    %cst_22 = arith.constant 3.200000e+01 : f32
    %32 = vector.broadcast %cst_22 : f32 to vector<1x256xf32>
    %33 = arith.divf %31, %32 : vector<1x256xf32>
    %cst_23 = arith.constant dense<0xFF800000> : vector<256xf32>
    %34 = vector.multi_reduction <maximumf>, %29, %cst_23 [0] : vector<32x256xf32> to vector<256xf32>
    %35 = vector.shape_cast %34 : vector<256xf32> to vector<1x256xf32>
    %cst_24 = arith.constant 0.000000e+00 : f32
    %36 = vector.broadcast %cst_24 : f32 to vector<2x310xf32>
    %c0_25 = arith.constant 0 : index
    %c0_26 = arith.constant 0 : index
    %37 = vector.load %arg8[%c0_25, %c0_26] : memref<2x310xf32, #tpu.memory_space<vmem>>, vector<2x310xf32>
    tpu.vector_store %arg8[%c0_25, %c0_26], %36 {strides = array<i32>} : memref<2x310xf32, #tpu.memory_space<vmem>>, vector<2x310xf32>,
    %c0_27 = arith.constant 0 : index
    %c27 = arith.constant 27 : index
    %38 = vector.load %arg8[%c0_27, %c27] : memref<2x310xf32, #tpu.memory_space<vmem>>, vector<1x256xf32>
    tpu.vector_store %arg8[%c0_27, %c27], %33 {strides = array<i32>} : memref<2x310xf32, #tpu.memory_space<vmem>>, vector<1x256xf32>,
    %c1 = arith.constant 1 : index
    %c27_28 = arith.constant 27 : index
    %39 = vector.load %arg8[%c1, %c27_28] : memref<2x310xf32, #tpu.memory_space<vmem>>, vector<1x256xf32>
    tpu.vector_store %arg8[%c1, %c27_28], %35 {strides = array<i32>} : memref<2x310xf32, #tpu.memory_space<vmem>>, vector<1x256xf32>,
    %cst_29 = arith.constant 0.000000e+00 : f32
    %40 = vector.broadcast %cst_29 : f32 to vector<2x256xf32>
    %c0_30 = arith.constant 0 : index
    %c0_31 = arith.constant 0 : index
    %c0_32 = arith.constant 0 : index
    %41 = vector.load %arg6[%c0_30, %c0_31, %c0_32] : memref<49x2x256xf32, #tpu.memory_space<vmem>>, vector<1x2x256xf32>
    %42 = vector.shape_cast %41 : vector<1x2x256xf32> to vector<2x256xf32>
    %c0_33 = arith.constant 0 : index
    %c0_34 = arith.constant 0 : index
    %43 = vector.load %arg8[%c0_33, %c0_34] : memref<2x310xf32, #tpu.memory_space<vmem>>, vector<2x256xf32>
    %44 = arith.mulf %42, %43 : vector<2x256xf32>
    %45 = arith.addf %40, %44 : vector<2x256xf32>
    %c1_35 = arith.constant 1 : index
    %c0_36 = arith.constant 0 : index
    %c0_37 = arith.constant 0 : index
    %46 = vector.load %arg6[%c1_35, %c0_36, %c0_37] : memref<49x2x256xf32, #tpu.memory_space<vmem>>, vector<1x2x256xf32>
    %47 = vector.shape_cast %46 : vector<1x2x256xf32> to vector<2x256xf32>
    %c0_38 = arith.constant 0 : index
    %c1_39 = arith.constant 1 : index
    %48 = vector.load %arg8[%c0_38, %c1_39] : memref<2x310xf32, #tpu.memory_space<vmem>>, vector<2x256xf32>
    %49 = arith.mulf %47, %48 : vector<2x256xf32>
    %50 = arith.addf %45, %49 : vector<2x256xf32>
    %c2 = arith.constant 2 : index
    %c0_40 = arith.constant 0 : index
    %c0_41 = arith.constant 0 : index
    %51 = vector.load %arg6[%c2, %c0_40, %c0_41] : memref<49x2x256xf32, #tpu.memory_space<vmem>>, vector<1x2x256xf32>
    %52 = vector.shape_cast %51 : vector<1x2x256xf32> to vector<2x256xf32>
    %c0_42 = arith.constant 0 : index
    %c2_43 = arith.constant 2 : index
    %53 = vector.load %arg8[%c0_42, %c2_43] : memref<2x310xf32, #tpu.memory_space<vmem>>, vector<2x256xf32>
    %54 = arith.mulf %52, %53 : vector<2x256xf32>
    %55 = arith.addf %50, %54 : vector<2x256xf32>
    %c3 = arith.constant 3 : index
    %c0_44 = arith.constant 0 : index
    %c0_45 = arith.constant 0 : index
    %56 = vector.load %arg6[%c3, %c0_44, %c0_45] : memref<49x2x256xf32, #tpu.memory_space<vmem>>, vector<1x2x256xf32>
    %57 = vector.shape_cast %56 : vector<1x2x256xf32> to vector<2x256xf32>
    %c0_46 = arith.constant 0 : index
    %c3_47 = arith.constant 3 : index
    %58 = vector.load %arg8[%c0_46, %c3_47] : memref<2x310xf32, #tpu.memory_space<vmem>>, vector<2x256xf32>
    %59 = arith.mulf %57, %58 : vector<2x256xf32>
    %60 = arith.addf %55, %59 : vector<2x256xf32>
    %c4 = arith.constant 4 : index
    %c0_48 = arith.constant 0 : index
    %c0_49 = arith.constant 0 : index
    %61 = vector.load %arg6[%c4, %c0_48, %c0_49] : memref<49x2x256xf32, #tpu.memory_space<vmem>>, vector<1x2x256xf32>
    %62 = vector.shape_cast %61 : vector<1x2x256xf32> to vector<2x256xf32>
    %c0_50 = arith.constant 0 : index
    %c4_51 = arith.constant 4 : index
    %63 = vector.load %arg8[%c0_50, %c4_51] : memref<2x310xf32, #tpu.memory_space<vmem>>, vector<2x256xf32>
    %64 = arith.mulf %62, %63 : vector<2x256xf32>
    %65 = arith.addf %60, %64 : vector<2x256xf32>
    %c5 = arith.constant 5 : index
    %c0_52 = arith.constant 0 : index
    %c0_53 = arith.constant 0 : index
    %66 = vector.load %arg6[%c5, %c0_52, %c0_53] : memref<49x2x256xf32, #tpu.memory_space<vmem>>, vector<1x2x256xf32>
    %67 = vector.shape_cast %66 : vector<1x2x256xf32> to vector<2x256xf32>
    %c0_54 = arith.constant 0 : index
    %c5_55 = arith.constant 5 : index
    %68 = vector.load %arg8[%c0_54, %c5_55] : memref<2x310xf32, #tpu.memory_space<vmem>>, vector<2x256xf32>
    %69 = arith.mulf %67, %68 : vector<2x256xf32>
    %70 = arith.addf %65, %69 : vector<2x256xf32>
    %c6 = arith.constant 6 : index
    %c0_56 = arith.constant 0 : index
    %c0_57 = arith.constant 0 : index
    %71 = vector.load %arg6[%c6, %c0_56, %c0_57] : memref<49x2x256xf32, #tpu.memory_space<vmem>>, vector<1x2x256xf32>
    %72 = vector.shape_cast %71 : vector<1x2x256xf32> to vector<2x256xf32>
    %c0_58 = arith.constant 0 : index
    %c6_59 = arith.constant 6 : index
    %73 = vector.load %arg8[%c0_58, %c6_59] : memref<2x310xf32, #tpu.memory_space<vmem>>, vector<2x256xf32>
    %74 = arith.mulf %72, %73 : vector<2x256xf32>
    %75 = arith.addf %70, %74 : vector<2x256xf32>
    %c7 = arith.constant 7 : index
    %c0_60 = arith.constant 0 : index
    %c0_61 = arith.constant 0 : index
    %76 = vector.load %arg6[%c7, %c0_60, %c0_61] : memref<49x2x256xf32, #tpu.memory_space<vmem>>, vector<1x2x256xf32>
    %77 = vector.shape_cast %76 : vector<1x2x256xf32> to vector<2x256xf32>
    %c0_62 = arith.constant 0 : index
    %c8 = arith.constant 8 : index
    %78 = vector.load %arg8[%c0_62, %c8] : memref<2x310xf32, #tpu.memory_space<vmem>>, vector<2x256xf32>
    %79 = arith.mulf %77, %78 : vector<2x256xf32>
    %80 = arith.addf %75, %79 : vector<2x256xf32>
    %c8_63 = arith.constant 8 : index
    %c0_64 = arith.constant 0 : index
    %c0_65 = arith.constant 0 : index
    %81 = vector.load %arg6[%c8_63, %c0_64, %c0_65] : memref<49x2x256xf32, #tpu.memory_space<vmem>>, vector<1x2x256xf32>
    %82 = vector.shape_cast %81 : vector<1x2x256xf32> to vector<2x256xf32>
    %c0_66 = arith.constant 0 : index
    %c9 = arith.constant 9 : index
    %83 = vector.load %arg8[%c0_66, %c9] : memref<2x310xf32, #tpu.memory_space<vmem>>, vector<2x256xf32>
    %84 = arith.mulf %82, %83 : vector<2x256xf32>
    %85 = arith.addf %80, %84 : vector<2x256xf32>
    %c9_67 = arith.constant 9 : index
    %c0_68 = arith.constant 0 : index
    %c0_69 = arith.constant 0 : index
    %86 = vector.load %arg6[%c9_67, %c0_68, %c0_69] : memref<49x2x256xf32, #tpu.memory_space<vmem>>, vector<1x2x256xf32>
    %87 = vector.shape_cast %86 : vector<1x2x256xf32> to vector<2x256xf32>
    %c0_70 = arith.constant 0 : index
    %c10 = arith.constant 10 : index
    %88 = vector.load %arg8[%c0_70, %c10] : memref<2x310xf32, #tpu.memory_space<vmem>>, vector<2x256xf32>
    %89 = arith.mulf %87, %88 : vector<2x256xf32>
    %90 = arith.addf %85, %89 : vector<2x256xf32>
    %c10_71 = arith.constant 10 : index
    %c0_72 = arith.constant 0 : index
    %c0_73 = arith.constant 0 : index
    %91 = vector.load %arg6[%c10_71, %c0_72, %c0_73] : memref<49x2x256xf32, #tpu.memory_space<vmem>>, vector<1x2x256xf32>
    %92 = vector.shape_cast %91 : vector<1x2x256xf32> to vector<2x256xf32>
    %c0_74 = arith.constant 0 : index
    %c11 = arith.constant 11 : index
    %93 = vector.load %arg8[%c0_74, %c11] : memref<2x310xf32, #tpu.memory_space<vmem>>, vector<2x256xf32>
    %94 = arith.mulf %92, %93 : vector<2x256xf32>
    %95 = arith.addf %90, %94 : vector<2x256xf32>
    %c11_75 = arith.constant 11 : index
    %c0_76 = arith.constant 0 : index
    %c0_77 = arith.constant 0 : index
    %96 = vector.load %arg6[%c11_75, %c0_76, %c0_77] : memref<49x2x256xf32, #tpu.memory_space<vmem>>, vector<1x2x256xf32>
    %97 = vector.shape_cast %96 : vector<1x2x256xf32> to vector<2x256xf32>
    %c0_78 = arith.constant 0 : index
    %c12 = arith.constant 12 : index
    %98 = vector.load %arg8[%c0_78, %c12] : memref<2x310xf32, #tpu.memory_space<vmem>>, vector<2x256xf32>
    %99 = arith.mulf %97, %98 : vector<2x256xf32>
    %100 = arith.addf %95, %99 : vector<2x256xf32>
    %c12_79 = arith.constant 12 : index
    %c0_80 = arith.constant 0 : index
    %c0_81 = arith.constant 0 : index
    %101 = vector.load %arg6[%c12_79, %c0_80, %c0_81] : memref<49x2x256xf32, #tpu.memory_space<vmem>>, vector<1x2x256xf32>
    %102 = vector.shape_cast %101 : vector<1x2x256xf32> to vector<2x256xf32>
    %c0_82 = arith.constant 0 : index
    %c13 = arith.constant 13 : index
    %103 = vector.load %arg8[%c0_82, %c13] : memref<2x310xf32, #tpu.memory_space<vmem>>, vector<2x256xf32>
    %104 = arith.mulf %102, %103 : vector<2x256xf32>
    %105 = arith.addf %100, %104 : vector<2x256xf32>
    %c13_83 = arith.constant 13 : index
    %c0_84 = arith.constant 0 : index
    %c0_85 = arith.constant 0 : index
    %106 = vector.load %arg6[%c13_83, %c0_84, %c0_85] : memref<49x2x256xf32, #tpu.memory_space<vmem>>, vector<1x2x256xf32>
    %107 = vector.shape_cast %106 : vector<1x2x256xf32> to vector<2x256xf32>
    %c0_86 = arith.constant 0 : index
    %c14 = arith.constant 14 : index
    %108 = vector.load %arg8[%c0_86, %c14] : memref<2x310xf32, #tpu.memory_space<vmem>>, vector<2x256xf32>
    %109 = arith.mulf %107, %108 : vector<2x256xf32>
    %110 = arith.addf %105, %109 : vector<2x256xf32>
    %c14_87 = arith.constant 14 : index
    %c0_88 = arith.constant 0 : index
    %c0_89 = arith.constant 0 : index
    %111 = vector.load %arg6[%c14_87, %c0_88, %c0_89] : memref<49x2x256xf32, #tpu.memory_space<vmem>>, vector<1x2x256xf32>
    %112 = vector.shape_cast %111 : vector<1x2x256xf32> to vector<2x256xf32>
    %c0_90 = arith.constant 0 : index
    %c16 = arith.constant 16 : index
    %113 = vector.load %arg8[%c0_90, %c16] : memref<2x310xf32, #tpu.memory_space<vmem>>, vector<2x256xf32>
    %114 = arith.mulf %112, %113 : vector<2x256xf32>
    %115 = arith.addf %110, %114 : vector<2x256xf32>
    %c15 = arith.constant 15 : index
    %c0_91 = arith.constant 0 : index
    %c0_92 = arith.constant 0 : index
    %116 = vector.load %arg6[%c15, %c0_91, %c0_92] : memref<49x2x256xf32, #tpu.memory_space<vmem>>, vector<1x2x256xf32>
    %117 = vector.shape_cast %116 : vector<1x2x256xf32> to vector<2x256xf32>
    %c0_93 = arith.constant 0 : index
    %c17 = arith.constant 17 : index
    %118 = vector.load %arg8[%c0_93, %c17] : memref<2x310xf32, #tpu.memory_space<vmem>>, vector<2x256xf32>
    %119 = arith.mulf %117, %118 : vector<2x256xf32>
    %120 = arith.addf %115, %119 : vector<2x256xf32>
    %c16_94 = arith.constant 16 : index
    %c0_95 = arith.constant 0 : index
    %c0_96 = arith.constant 0 : index
    %121 = vector.load %arg6[%c16_94, %c0_95, %c0_96] : memref<49x2x256xf32, #tpu.memory_space<vmem>>, vector<1x2x256xf32>
    %122 = vector.shape_cast %121 : vector<1x2x256xf32> to vector<2x256xf32>
    %c0_97 = arith.constant 0 : index
    %c18 = arith.constant 18 : index
    %123 = vector.load %arg8[%c0_97, %c18] : memref<2x310xf32, #tpu.memory_space<vmem>>, vector<2x256xf32>
    %124 = arith.mulf %122, %123 : vector<2x256xf32>
    %125 = arith.addf %120, %124 : vector<2x256xf32>
    %c17_98 = arith.constant 17 : index
    %c0_99 = arith.constant 0 : index
    %c0_100 = arith.constant 0 : index
    %126 = vector.load %arg6[%c17_98, %c0_99, %c0_100] : memref<49x2x256xf32, #tpu.memory_space<vmem>>, vector<1x2x256xf32>
    %127 = vector.shape_cast %126 : vector<1x2x256xf32> to vector<2x256xf32>
    %c0_101 = arith.constant 0 : index
    %c19 = arith.constant 19 : index
    %128 = vector.load %arg8[%c0_101, %c19] : memref<2x310xf32, #tpu.memory_space<vmem>>, vector<2x256xf32>
    %129 = arith.mulf %127, %128 : vector<2x256xf32>
    %130 = arith.addf %125, %129 : vector<2x256xf32>
    %c18_102 = arith.constant 18 : index
    %c0_103 = arith.constant 0 : index
    %c0_104 = arith.constant 0 : index
    %131 = vector.load %arg6[%c18_102, %c0_103, %c0_104] : memref<49x2x256xf32, #tpu.memory_space<vmem>>, vector<1x2x256xf32>
    %132 = vector.shape_cast %131 : vector<1x2x256xf32> to vector<2x256xf32>
    %c0_105 = arith.constant 0 : index
    %c20 = arith.constant 20 : index
    %133 = vector.load %arg8[%c0_105, %c20] : memref<2x310xf32, #tpu.memory_space<vmem>>, vector<2x256xf32>
    %134 = arith.mulf %132, %133 : vector<2x256xf32>
    %135 = arith.addf %130, %134 : vector<2x256xf32>
    %c19_106 = arith.constant 19 : index
    %c0_107 = arith.constant 0 : index
    %c0_108 = arith.constant 0 : index
    %136 = vector.load %arg6[%c19_106, %c0_107, %c0_108] : memref<49x2x256xf32, #tpu.memory_space<vmem>>, vector<1x2x256xf32>
    %137 = vector.shape_cast %136 : vector<1x2x256xf32> to vector<2x256xf32>
    %c0_109 = arith.constant 0 : index
    %c21 = arith.constant 21 : index
    %138 = vector.load %arg8[%c0_109, %c21] : memref<2x310xf32, #tpu.memory_space<vmem>>, vector<2x256xf32>
    %139 = arith.mulf %137, %138 : vector<2x256xf32>
    %140 = arith.addf %135, %139 : vector<2x256xf32>
    %c20_110 = arith.constant 20 : index
    %c0_111 = arith.constant 0 : index
    %c0_112 = arith.constant 0 : index
    %141 = vector.load %arg6[%c20_110, %c0_111, %c0_112] : memref<49x2x256xf32, #tpu.memory_space<vmem>>, vector<1x2x256xf32>
    %142 = vector.shape_cast %141 : vector<1x2x256xf32> to vector<2x256xf32>
    %c0_113 = arith.constant 0 : index
    %c22 = arith.constant 22 : index
    %143 = vector.load %arg8[%c0_113, %c22] : memref<2x310xf32, #tpu.memory_space<vmem>>, vector<2x256xf32>
    %144 = arith.mulf %142, %143 : vector<2x256xf32>
    %145 = arith.addf %140, %144 : vector<2x256xf32>
    %c21_114 = arith.constant 21 : index
    %c0_115 = arith.constant 0 : index
    %c0_116 = arith.constant 0 : index
    %146 = vector.load %arg6[%c21_114, %c0_115, %c0_116] : memref<49x2x256xf32, #tpu.memory_space<vmem>>, vector<1x2x256xf32>
    %147 = vector.shape_cast %146 : vector<1x2x256xf32> to vector<2x256xf32>
    %c0_117 = arith.constant 0 : index
    %c24 = arith.constant 24 : index
    %148 = vector.load %arg8[%c0_117, %c24] : memref<2x310xf32, #tpu.memory_space<vmem>>, vector<2x256xf32>
    %149 = arith.mulf %147, %148 : vector<2x256xf32>
    %150 = arith.addf %145, %149 : vector<2x256xf32>
    %c22_118 = arith.constant 22 : index
    %c0_119 = arith.constant 0 : index
    %c0_120 = arith.constant 0 : index
    %151 = vector.load %arg6[%c22_118, %c0_119, %c0_120] : memref<49x2x256xf32, #tpu.memory_space<vmem>>, vector<1x2x256xf32>
    %152 = vector.shape_cast %151 : vector<1x2x256xf32> to vector<2x256xf32>
    %c0_121 = arith.constant 0 : index
    %c25 = arith.constant 25 : index
    %153 = vector.load %arg8[%c0_121, %c25] : memref<2x310xf32, #tpu.memory_space<vmem>>, vector<2x256xf32>
    %154 = arith.mulf %152, %153 : vector<2x256xf32>
    %155 = arith.addf %150, %154 : vector<2x256xf32>
    %c23 = arith.constant 23 : index
    %c0_122 = arith.constant 0 : index
    %c0_123 = arith.constant 0 : index
    %156 = vector.load %arg6[%c23, %c0_122, %c0_123] : memref<49x2x256xf32, #tpu.memory_space<vmem>>, vector<1x2x256xf32>
    %157 = vector.shape_cast %156 : vector<1x2x256xf32> to vector<2x256xf32>
    %c0_124 = arith.constant 0 : index
    %c26 = arith.constant 26 : index
    %158 = vector.load %arg8[%c0_124, %c26] : memref<2x310xf32, #tpu.memory_space<vmem>>, vector<2x256xf32>
    %159 = arith.mulf %157, %158 : vector<2x256xf32>
    %160 = arith.addf %155, %159 : vector<2x256xf32>
    %c24_125 = arith.constant 24 : index
    %c0_126 = arith.constant 0 : index
    %c0_127 = arith.constant 0 : index
    %161 = vector.load %arg6[%c24_125, %c0_126, %c0_127] : memref<49x2x256xf32, #tpu.memory_space<vmem>>, vector<1x2x256xf32>
    %162 = vector.shape_cast %161 : vector<1x2x256xf32> to vector<2x256xf32>
    %c0_128 = arith.constant 0 : index
    %c27_129 = arith.constant 27 : index
    %163 = vector.load %arg8[%c0_128, %c27_129] : memref<2x310xf32, #tpu.memory_space<vmem>>, vector<2x256xf32>
    %164 = arith.mulf %162, %163 : vector<2x256xf32>
    %165 = arith.addf %160, %164 : vector<2x256xf32>
    %c25_130 = arith.constant 25 : index
    %c0_131 = arith.constant 0 : index
    %c0_132 = arith.constant 0 : index
    %166 = vector.load %arg6[%c25_130, %c0_131, %c0_132] : memref<49x2x256xf32, #tpu.memory_space<vmem>>, vector<1x2x256xf32>
    %167 = vector.shape_cast %166 : vector<1x2x256xf32> to vector<2x256xf32>
    %c0_133 = arith.constant 0 : index
    %c28 = arith.constant 28 : index
    %168 = vector.load %arg8[%c0_133, %c28] : memref<2x310xf32, #tpu.memory_space<vmem>>, vector<2x256xf32>
    %169 = arith.mulf %167, %168 : vector<2x256xf32>
    %170 = arith.addf %165, %169 : vector<2x256xf32>
    %c26_134 = arith.constant 26 : index
    %c0_135 = arith.constant 0 : index
    %c0_136 = arith.constant 0 : index
    %171 = vector.load %arg6[%c26_134, %c0_135, %c0_136] : memref<49x2x256xf32, #tpu.memory_space<vmem>>, vector<1x2x256xf32>
    %172 = vector.shape_cast %171 : vector<1x2x256xf32> to vector<2x256xf32>
    %c0_137 = arith.constant 0 : index
    %c29 = arith.constant 29 : index
    %173 = vector.load %arg8[%c0_137, %c29] : memref<2x310xf32, #tpu.memory_space<vmem>>, vector<2x256xf32>
    %174 = arith.mulf %172, %173 : vector<2x256xf32>
    %175 = arith.addf %170, %174 : vector<2x256xf32>
    %c27_138 = arith.constant 27 : index
    %c0_139 = arith.constant 0 : index
    %c0_140 = arith.constant 0 : index
    %176 = vector.load %arg6[%c27_138, %c0_139, %c0_140] : memref<49x2x256xf32, #tpu.memory_space<vmem>>, vector<1x2x256xf32>
    %177 = vector.shape_cast %176 : vector<1x2x256xf32> to vector<2x256xf32>
    %c0_141 = arith.constant 0 : index
    %c30 = arith.constant 30 : index
    %178 = vector.load %arg8[%c0_141, %c30] : memref<2x310xf32, #tpu.memory_space<vmem>>, vector<2x256xf32>
    %179 = arith.mulf %177, %178 : vector<2x256xf32>
    %180 = arith.addf %175, %179 : vector<2x256xf32>
    %c28_142 = arith.constant 28 : index
    %c0_143 = arith.constant 0 : index
    %c0_144 = arith.constant 0 : index
    %181 = vector.load %arg6[%c28_142, %c0_143, %c0_144] : memref<49x2x256xf32, #tpu.memory_space<vmem>>, vector<1x2x256xf32>
    %182 = vector.shape_cast %181 : vector<1x2x256xf32> to vector<2x256xf32>
    %c0_145 = arith.constant 0 : index
    %c32 = arith.constant 32 : index
    %183 = vector.load %arg8[%c0_145, %c32] : memref<2x310xf32, #tpu.memory_space<vmem>>, vector<2x256xf32>
    %184 = arith.mulf %182, %183 : vector<2x256xf32>
    %185 = arith.addf %180, %184 : vector<2x256xf32>
    %c29_146 = arith.constant 29 : index
    %c0_147 = arith.constant 0 : index
    %c0_148 = arith.constant 0 : index
    %186 = vector.load %arg6[%c29_146, %c0_147, %c0_148] : memref<49x2x256xf32, #tpu.memory_space<vmem>>, vector<1x2x256xf32>
    %187 = vector.shape_cast %186 : vector<1x2x256xf32> to vector<2x256xf32>
    %c0_149 = arith.constant 0 : index
    %c33 = arith.constant 33 : index
    %188 = vector.load %arg8[%c0_149, %c33] : memref<2x310xf32, #tpu.memory_space<vmem>>, vector<2x256xf32>
    %189 = arith.mulf %187, %188 : vector<2x256xf32>
    %190 = arith.addf %185, %189 : vector<2x256xf32>
    %c30_150 = arith.constant 30 : index
    %c0_151 = arith.constant 0 : index
    %c0_152 = arith.constant 0 : index
    %191 = vector.load %arg6[%c30_150, %c0_151, %c0_152] : memref<49x2x256xf32, #tpu.memory_space<vmem>>, vector<1x2x256xf32>
    %192 = vector.shape_cast %191 : vector<1x2x256xf32> to vector<2x256xf32>
    %c0_153 = arith.constant 0 : index
    %c34 = arith.constant 34 : index
    %193 = vector.load %arg8[%c0_153, %c34] : memref<2x310xf32, #tpu.memory_space<vmem>>, vector<2x256xf32>
    %194 = arith.mulf %192, %193 : vector<2x256xf32>
    %195 = arith.addf %190, %194 : vector<2x256xf32>
    %c31 = arith.constant 31 : index
    %c0_154 = arith.constant 0 : index
    %c0_155 = arith.constant 0 : index
    %196 = vector.load %arg6[%c31, %c0_154, %c0_155] : memref<49x2x256xf32, #tpu.memory_space<vmem>>, vector<1x2x256xf32>
    %197 = vector.shape_cast %196 : vector<1x2x256xf32> to vector<2x256xf32>
    %c0_156 = arith.constant 0 : index
    %c35 = arith.constant 35 : index
    %198 = vector.load %arg8[%c0_156, %c35] : memref<2x310xf32, #tpu.memory_space<vmem>>, vector<2x256xf32>
    %199 = arith.mulf %197, %198 : vector<2x256xf32>
    %200 = arith.addf %195, %199 : vector<2x256xf32>
    %c32_157 = arith.constant 32 : index
    %c0_158 = arith.constant 0 : index
    %c0_159 = arith.constant 0 : index
    %201 = vector.load %arg6[%c32_157, %c0_158, %c0_159] : memref<49x2x256xf32, #tpu.memory_space<vmem>>, vector<1x2x256xf32>
    %202 = vector.shape_cast %201 : vector<1x2x256xf32> to vector<2x256xf32>
    %c0_160 = arith.constant 0 : index
    %c36 = arith.constant 36 : index
    %203 = vector.load %arg8[%c0_160, %c36] : memref<2x310xf32, #tpu.memory_space<vmem>>, vector<2x256xf32>
    %204 = arith.mulf %202, %203 : vector<2x256xf32>
    %205 = arith.addf %200, %204 : vector<2x256xf32>
    %c33_161 = arith.constant 33 : index
    %c0_162 = arith.constant 0 : index
    %c0_163 = arith.constant 0 : index
    %206 = vector.load %arg6[%c33_161, %c0_162, %c0_163] : memref<49x2x256xf32, #tpu.memory_space<vmem>>, vector<1x2x256xf32>
    %207 = vector.shape_cast %206 : vector<1x2x256xf32> to vector<2x256xf32>
    %c0_164 = arith.constant 0 : index
    %c37 = arith.constant 37 : index
    %208 = vector.load %arg8[%c0_164, %c37] : memref<2x310xf32, #tpu.memory_space<vmem>>, vector<2x256xf32>
    %209 = arith.mulf %207, %208 : vector<2x256xf32>
    %210 = arith.addf %205, %209 : vector<2x256xf32>
    %c34_165 = arith.constant 34 : index
    %c0_166 = arith.constant 0 : index
    %c0_167 = arith.constant 0 : index
    %211 = vector.load %arg6[%c34_165, %c0_166, %c0_167] : memref<49x2x256xf32, #tpu.memory_space<vmem>>, vector<1x2x256xf32>
    %212 = vector.shape_cast %211 : vector<1x2x256xf32> to vector<2x256xf32>
    %c0_168 = arith.constant 0 : index
    %c38 = arith.constant 38 : index
    %213 = vector.load %arg8[%c0_168, %c38] : memref<2x310xf32, #tpu.memory_space<vmem>>, vector<2x256xf32>
    %214 = arith.mulf %212, %213 : vector<2x256xf32>
    %215 = arith.addf %210, %214 : vector<2x256xf32>
    %c35_169 = arith.constant 35 : index
    %c0_170 = arith.constant 0 : index
    %c0_171 = arith.constant 0 : index
    %216 = vector.load %arg6[%c35_169, %c0_170, %c0_171] : memref<49x2x256xf32, #tpu.memory_space<vmem>>, vector<1x2x256xf32>
    %217 = vector.shape_cast %216 : vector<1x2x256xf32> to vector<2x256xf32>
    %c0_172 = arith.constant 0 : index
    %c40 = arith.constant 40 : index
    %218 = vector.load %arg8[%c0_172, %c40] : memref<2x310xf32, #tpu.memory_space<vmem>>, vector<2x256xf32>
    %219 = arith.mulf %217, %218 : vector<2x256xf32>
    %220 = arith.addf %215, %219 : vector<2x256xf32>
    %c36_173 = arith.constant 36 : index
    %c0_174 = arith.constant 0 : index
    %c0_175 = arith.constant 0 : index
    %221 = vector.load %arg6[%c36_173, %c0_174, %c0_175] : memref<49x2x256xf32, #tpu.memory_space<vmem>>, vector<1x2x256xf32>
    %222 = vector.shape_cast %221 : vector<1x2x256xf32> to vector<2x256xf32>
    %c0_176 = arith.constant 0 : index
    %c41 = arith.constant 41 : index
    %223 = vector.load %arg8[%c0_176, %c41] : memref<2x310xf32, #tpu.memory_space<vmem>>, vector<2x256xf32>
    %224 = arith.mulf %222, %223 : vector<2x256xf32>
    %225 = arith.addf %220, %224 : vector<2x256xf32>
    %c37_177 = arith.constant 37 : index
    %c0_178 = arith.constant 0 : index
    %c0_179 = arith.constant 0 : index
    %226 = vector.load %arg6[%c37_177, %c0_178, %c0_179] : memref<49x2x256xf32, #tpu.memory_space<vmem>>, vector<1x2x256xf32>
    %227 = vector.shape_cast %226 : vector<1x2x256xf32> to vector<2x256xf32>
    %c0_180 = arith.constant 0 : index
    %c42 = arith.constant 42 : index
    %228 = vector.load %arg8[%c0_180, %c42] : memref<2x310xf32, #tpu.memory_space<vmem>>, vector<2x256xf32>
    %229 = arith.mulf %227, %228 : vector<2x256xf32>
    %230 = arith.addf %225, %229 : vector<2x256xf32>
    %c38_181 = arith.constant 38 : index
    %c0_182 = arith.constant 0 : index
    %c0_183 = arith.constant 0 : index
    %231 = vector.load %arg6[%c38_181, %c0_182, %c0_183] : memref<49x2x256xf32, #tpu.memory_space<vmem>>, vector<1x2x256xf32>
    %232 = vector.shape_cast %231 : vector<1x2x256xf32> to vector<2x256xf32>
    %c0_184 = arith.constant 0 : index
    %c43 = arith.constant 43 : index
    %233 = vector.load %arg8[%c0_184, %c43] : memref<2x310xf32, #tpu.memory_space<vmem>>, vector<2x256xf32>
    %234 = arith.mulf %232, %233 : vector<2x256xf32>
    %235 = arith.addf %230, %234 : vector<2x256xf32>
    %c39 = arith.constant 39 : index
    %c0_185 = arith.constant 0 : index
    %c0_186 = arith.constant 0 : index
    %236 = vector.load %arg6[%c39, %c0_185, %c0_186] : memref<49x2x256xf32, #tpu.memory_space<vmem>>, vector<1x2x256xf32>
    %237 = vector.shape_cast %236 : vector<1x2x256xf32> to vector<2x256xf32>
    %c0_187 = arith.constant 0 : index
    %c44 = arith.constant 44 : index
    %238 = vector.load %arg8[%c0_187, %c44] : memref<2x310xf32, #tpu.memory_space<vmem>>, vector<2x256xf32>
    %239 = arith.mulf %237, %238 : vector<2x256xf32>
    %240 = arith.addf %235, %239 : vector<2x256xf32>
    %c40_188 = arith.constant 40 : index
    %c0_189 = arith.constant 0 : index
    %c0_190 = arith.constant 0 : index
    %241 = vector.load %arg6[%c40_188, %c0_189, %c0_190] : memref<49x2x256xf32, #tpu.memory_space<vmem>>, vector<1x2x256xf32>
    %242 = vector.shape_cast %241 : vector<1x2x256xf32> to vector<2x256xf32>
    %c0_191 = arith.constant 0 : index
    %c45 = arith.constant 45 : index
    %243 = vector.load %arg8[%c0_191, %c45] : memref<2x310xf32, #tpu.memory_space<vmem>>, vector<2x256xf32>
    %244 = arith.mulf %242, %243 : vector<2x256xf32>
    %245 = arith.addf %240, %244 : vector<2x256xf32>
    %c41_192 = arith.constant 41 : index
    %c0_193 = arith.constant 0 : index
    %c0_194 = arith.constant 0 : index
    %246 = vector.load %arg6[%c41_192, %c0_193, %c0_194] : memref<49x2x256xf32, #tpu.memory_space<vmem>>, vector<1x2x256xf32>
    %247 = vector.shape_cast %246 : vector<1x2x256xf32> to vector<2x256xf32>
    %c0_195 = arith.constant 0 : index
    %c46 = arith.constant 46 : index
    %248 = vector.load %arg8[%c0_195, %c46] : memref<2x310xf32, #tpu.memory_space<vmem>>, vector<2x256xf32>
    %249 = arith.mulf %247, %248 : vector<2x256xf32>
    %250 = arith.addf %245, %249 : vector<2x256xf32>
    %c42_196 = arith.constant 42 : index
    %c0_197 = arith.constant 0 : index
    %c0_198 = arith.constant 0 : index
    %251 = vector.load %arg6[%c42_196, %c0_197, %c0_198] : memref<49x2x256xf32, #tpu.memory_space<vmem>>, vector<1x2x256xf32>
    %252 = vector.shape_cast %251 : vector<1x2x256xf32> to vector<2x256xf32>
    %c0_199 = arith.constant 0 : index
    %c48 = arith.constant 48 : index
    %253 = vector.load %arg8[%c0_199, %c48] : memref<2x310xf32, #tpu.memory_space<vmem>>, vector<2x256xf32>
    %254 = arith.mulf %252, %253 : vector<2x256xf32>
    %255 = arith.addf %250, %254 : vector<2x256xf32>
    %c43_200 = arith.constant 43 : index
    %c0_201 = arith.constant 0 : index
    %c0_202 = arith.constant 0 : index
    %256 = vector.load %arg6[%c43_200, %c0_201, %c0_202] : memref<49x2x256xf32, #tpu.memory_space<vmem>>, vector<1x2x256xf32>
    %257 = vector.shape_cast %256 : vector<1x2x256xf32> to vector<2x256xf32>
    %c0_203 = arith.constant 0 : index
    %c49 = arith.constant 49 : index
    %258 = vector.load %arg8[%c0_203, %c49] : memref<2x310xf32, #tpu.memory_space<vmem>>, vector<2x256xf32>
    %259 = arith.mulf %257, %258 : vector<2x256xf32>
    %260 = arith.addf %255, %259 : vector<2x256xf32>
    %c44_204 = arith.constant 44 : index
    %c0_205 = arith.constant 0 : index
    %c0_206 = arith.constant 0 : index
    %261 = vector.load %arg6[%c44_204, %c0_205, %c0_206] : memref<49x2x256xf32, #tpu.memory_space<vmem>>, vector<1x2x256xf32>
    %262 = vector.shape_cast %261 : vector<1x2x256xf32> to vector<2x256xf32>
    %c0_207 = arith.constant 0 : index
    %c50 = arith.constant 50 : index
    %263 = vector.load %arg8[%c0_207, %c50] : memref<2x310xf32, #tpu.memory_space<vmem>>, vector<2x256xf32>
    %264 = arith.mulf %262, %263 : vector<2x256xf32>
    %265 = arith.addf %260, %264 : vector<2x256xf32>
    %c45_208 = arith.constant 45 : index
    %c0_209 = arith.constant 0 : index
    %c0_210 = arith.constant 0 : index
    %266 = vector.load %arg6[%c45_208, %c0_209, %c0_210] : memref<49x2x256xf32, #tpu.memory_space<vmem>>, vector<1x2x256xf32>
    %267 = vector.shape_cast %266 : vector<1x2x256xf32> to vector<2x256xf32>
    %c0_211 = arith.constant 0 : index
    %c51 = arith.constant 51 : index
    %268 = vector.load %arg8[%c0_211, %c51] : memref<2x310xf32, #tpu.memory_space<vmem>>, vector<2x256xf32>
    %269 = arith.mulf %267, %268 : vector<2x256xf32>
    %270 = arith.addf %265, %269 : vector<2x256xf32>
    %c46_212 = arith.constant 46 : index
    %c0_213 = arith.constant 0 : index
    %c0_214 = arith.constant 0 : index
    %271 = vector.load %arg6[%c46_212, %c0_213, %c0_214] : memref<49x2x256xf32, #tpu.memory_space<vmem>>, vector<1x2x256xf32>
    %272 = vector.shape_cast %271 : vector<1x2x256xf32> to vector<2x256xf32>
    %c0_215 = arith.constant 0 : index
    %c52 = arith.constant 52 : index
    %273 = vector.load %arg8[%c0_215, %c52] : memref<2x310xf32, #tpu.memory_space<vmem>>, vector<2x256xf32>
    %274 = arith.mulf %272, %273 : vector<2x256xf32>
    %275 = arith.addf %270, %274 : vector<2x256xf32>
    %c47 = arith.constant 47 : index
    %c0_216 = arith.constant 0 : index
    %c0_217 = arith.constant 0 : index
    %276 = vector.load %arg6[%c47, %c0_216, %c0_217] : memref<49x2x256xf32, #tpu.memory_space<vmem>>, vector<1x2x256xf32>
    %277 = vector.shape_cast %276 : vector<1x2x256xf32> to vector<2x256xf32>
    %c0_218 = arith.constant 0 : index
    %c53 = arith.constant 53 : index
    %278 = vector.load %arg8[%c0_218, %c53] : memref<2x310xf32, #tpu.memory_space<vmem>>, vector<2x256xf32>
    %279 = arith.mulf %277, %278 : vector<2x256xf32>
    %280 = arith.addf %275, %279 : vector<2x256xf32>
    %c48_219 = arith.constant 48 : index
    %c0_220 = arith.constant 0 : index
    %c0_221 = arith.constant 0 : index
    %281 = vector.load %arg6[%c48_219, %c0_220, %c0_221] : memref<49x2x256xf32, #tpu.memory_space<vmem>>, vector<1x2x256xf32>
    %282 = vector.shape_cast %281 : vector<1x2x256xf32> to vector<2x256xf32>
    %c0_222 = arith.constant 0 : index
    %c54 = arith.constant 54 : index
    %283 = vector.load %arg8[%c0_222, %c54] : memref<2x310xf32, #tpu.memory_space<vmem>>, vector<2x256xf32>
    %284 = arith.mulf %282, %283 : vector<2x256xf32>
    %285 = arith.addf %280, %284 : vector<2x256xf32>
    %cst_223 = arith.constant dense<0.000000e+00> : vector<256xf32>
    %286 = vector.multi_reduction <add>, %285, %cst_223 [0] : vector<2x256xf32> to vector<256xf32>
    %287 = vector.shape_cast %286 : vector<256xf32> to vector<1x256xf32>
    %cst_224 = arith.constant 0.000000e+00 : f32
    %288 = vector.broadcast %cst_224 : f32 to vector<1x256xf32>
    %289 = arith.subf %288, %287 : vector<1x256xf32>
    %290 = math.exp %289 : vector<1x256xf32>
    %cst_225 = arith.constant 1.000000e+00 : f32
    %291 = vector.broadcast %cst_225 : f32 to vector<1x256xf32>
    %292 = arith.addf %291, %290 : vector<1x256xf32>
    %cst_226 = arith.constant 1.000000e+00 : f32
    %293 = vector.broadcast %cst_226 : f32 to vector<1x256xf32>
    %294 = arith.divf %293, %292 : vector<1x256xf32>
    %295 = vector.broadcast %294 : vector<1x256xf32> to vector<32x256xf32>
    %296 = arith.mulf %29, %295 : vector<32x256xf32>
    %cst_227 = arith.constant dense<0.000000e+00> : vector<32xf32>
    %297 = vector.multi_reduction <add>, %296, %cst_227 [1] : vector<32x256xf32> to vector<32xf32>
    %298 = vector.shape_cast %297 : vector<32xf32> to vector<32x1xf32>
    %cst_228 = arith.constant 2.560000e+02 : f32
    %299 = vector.broadcast %cst_228 : f32 to vector<32x1xf32>
    %300 = arith.divf %298, %299 : vector<32x1xf32>
    %c0_229 = arith.constant 0 : index
    %c0_230 = arith.constant 0 : index
    %301 = vector.load %arg4[%c0_229, %c0_230] : memref<4x32xf32, #tpu.memory_space<vmem>>, vector<4x32xf32>
    %c0_231 = arith.constant 0 : index
    %c0_232 = arith.constant 0 : index
    %302 = vector.load %arg5[%c0_231, %c0_232] : memref<32x4xf32, #tpu.memory_space<vmem>>, vector<32x4xf32>
    %cst_233 = arith.constant dense<0.000000e+00> : vector<4x1xf32>
    %303 = tpu.matmul %301, %300, %cst_233 {dimension_numbers = #tpu.dot_dimension_numbers<[1], [0], [0], [1], [0, 0, 1, 1], [], []>} : vector<4x32xf32>, vector<32x1xf32>, vector<4x1xf32> -> vector<4x1xf32>
    %cst_234 = arith.constant 0.000000e+00 : f32
    %304 = vector.broadcast %cst_234 : f32 to vector<4x1xf32>
    %305 = arith.maximumf %303, %304 : vector<4x1xf32>
    %cst_235 = arith.constant dense<0.000000e+00> : vector<32x1xf32>
    %306 = tpu.matmul %302, %305, %cst_235 {dimension_numbers = #tpu.dot_dimension_numbers<[1], [0], [0], [1], [0, 0, 1, 1], [], []>} : vector<32x4xf32>, vector<4x1xf32>, vector<32x1xf32> -> vector<32x1xf32>
    %cst_236 = arith.constant 0.000000e+00 : f32
    %307 = vector.broadcast %cst_236 : f32 to vector<32x1xf32>
    %308 = arith.subf %307, %306 : vector<32x1xf32>
    %309 = math.exp %308 : vector<32x1xf32>
    %cst_237 = arith.constant 1.000000e+00 : f32
    %310 = vector.broadcast %cst_237 : f32 to vector<32x1xf32>
    %311 = arith.addf %310, %309 : vector<32x1xf32>
    %cst_238 = arith.constant 1.000000e+00 : f32
    %312 = vector.broadcast %cst_238 : f32 to vector<32x1xf32>
    %313 = arith.divf %312, %311 : vector<32x1xf32>
    %314 = vector.broadcast %313 : vector<32x1xf32> to vector<32x256xf32>
    %315 = arith.mulf %296, %314 : vector<32x256xf32>
    %c0_239 = arith.constant 0 : index
    %c0_240 = arith.constant 0 : index
    %c0_241 = arith.constant 0 : index
    %316 = vector.load %arg7[%c0_239, %c0_240, %c0_241] : memref<1x32x256xf32, #tpu.memory_space<vmem>>, vector<1x32x256xf32>
    %317 = vector.shape_cast %316 : vector<1x32x256xf32> to vector<32x256xf32>
    %318 = vector.shape_cast %315 : vector<32x256xf32> to vector<1x32x256xf32>
    tpu.vector_store %arg7[%c0_239, %c0_240, %c0_241], %318 {strides = array<i32>} : memref<1x32x256xf32, #tpu.memory_space<vmem>>, vector<1x32x256xf32>,
    return
  }
  func.func @transform_0(%arg0: i32) -> (i32, i32, i32) {
    %c0_i32 = arith.constant 0 : i32
    %c0_i32_0 = arith.constant 0 : i32
    %c0_i32_1 = arith.constant 0 : i32
    return %arg0, %c0_i32, %c0_i32_0 : i32, i32, i32
  }
  func.func @transform_1(%arg0: i32) -> (i32, i32) {
    %c0_i32 = arith.constant 0 : i32
    %c0_i32_0 = arith.constant 0 : i32
    %c0_i32_1 = arith.constant 0 : i32
    return %c0_i32, %c0_i32_0 : i32, i32
  }
  func.func @transform_2(%arg0: i32) -> (i32, i32) {
    %c0_i32 = arith.constant 0 : i32
    %c0_i32_0 = arith.constant 0 : i32
    %c0_i32_1 = arith.constant 0 : i32
    return %c0_i32, %c0_i32_0 : i32, i32
  }
  func.func @transform_3(%arg0: i32) -> (i32, i32) {
    %c0_i32 = arith.constant 0 : i32
    %c0_i32_0 = arith.constant 0 : i32
    %c0_i32_1 = arith.constant 0 : i32
    return %c0_i32, %c0_i32_0 : i32, i32
  }
  func.func @transform_4(%arg0: i32) -> (i32, i32) {
    %c0_i32 = arith.constant 0 : i32
    %c0_i32_0 = arith.constant 0 : i32
    %c0_i32_1 = arith.constant 0 : i32
    return %c0_i32, %c0_i32_0 : i32, i32
  }
  func.func @transform_5(%arg0: i32) -> (i32, i32, i32) {
    %c0_i32 = arith.constant 0 : i32
    %c0_i32_0 = arith.constant 0 : i32
    %c0_i32_1 = arith.constant 0 : i32
    %c0_i32_2 = arith.constant 0 : i32
    return %c0_i32, %c0_i32_0, %c0_i32_1 : i32, i32, i32
  }
  func.func @transform_6(%arg0: i32) -> (i32, i32, i32) {
    %c0_i32 = arith.constant 0 : i32
    %c0_i32_0 = arith.constant 0 : i32
    %c0_i32_1 = arith.constant 0 : i32
    return %arg0, %c0_i32, %c0_i32_0 : i32, i32, i32
  }
}

</mosaic_0001>

<llo_original>
// kernel: hybrid_attention.1
$region0: #{hybrid_attention.1}
  #allocation0 [shape = 'u32[]', space=smem, size = 0x4, offset = 0x4, fixed_abs, tag = 'smem constant byte address 0x4 - core index']
  #allocation1 [shape = 'u32[144,128]{1,0:T(1,128)}', space=vmem, size = 0x12000, scoped, tag = 'internal scratch']
  #allocation2 [shape = 'f32[2,310]{1,0:T(2,128)}', space=vmem, size = 0xc00, scoped, tag = 'scratch operand']
  %s0 = inlined_call_operand.vmem [shape: f32[2,32,256], index: 0, kind: input, shape index: {}]
  %s1 = inlined_call_operand.vmem [shape: f32[4,32], index: 1, kind: input, shape index: {}]
  %s2 = inlined_call_operand.vmem [shape: f32[32,4], index: 2, kind: input, shape index: {}]
  %s3 = inlined_call_operand.vmem [shape: f32[4,32], index: 3, kind: input, shape index: {}]
  %s4 = inlined_call_operand.vmem [shape: f32[32,4], index: 4, kind: input, shape index: {}]
  %s5 = inlined_call_operand.vmem [shape: f32[49,2,256], index: 5, kind: input, shape index: {}]
  %s6 = inlined_call_operand.vmem [shape: f32[2,32,256], index: 6, kind: output, shape index: {}]
  %s7 = sld [smem:[#allocation0]]
  $region57: #{hybrid_attention.1} parent=0
    _
  %s9 = ssub.s32 1, %s7
  %s10 = scalar_select 0, %s9, %s7
  loop: start=0, step=1, limit=4
  $region2: #{hybrid_attention.1} parent=0 // loop_pre_header
    _
  $region3: #{hybrid_attention.1} parent=0 // loop_header
    %s12 = sphi 0, %s16
    %p13 = scmp.ge.s32.totalorder %s12, 4
    %s22 = sphi 0, %s24
    %s25 = sphi 0, %s22
    %s26 = sphi 0, %s25
    %s42 = sphi 0, %s26
    %s46 = sphi 0, %s46
    %s48 = sphi 0, %s46
    %s49 = sphi 0, %s48
    %s63 = sphi 0, %s49
    %s67 = sphi 0, %s67
    %s69 = sphi 0, %s67
    %s70 = sphi 0, %s69
    %s84 = sphi 0, %s70
    %s88 = sphi 0, %s88
    %s90 = sphi 0, %s88
    %s91 = sphi 0, %s90
    %s105 = sphi 0, %s91
    %s109 = sphi 0, %s109
    %s111 = sphi 0, %s109
    %s112 = sphi 0, %s111
    %s126 = sphi 0, %s112
    %s130 = sphi 0, %s130
    %s132 = sphi 0, %s130
    %s133 = sphi 0, %s132
    %s147 = sphi 0, %s133
    %s153 = sphi 0, %s155
    %s156 = sphi 0, %s153
    %s157 = sphi 0, %s156
    %s173 = sphi 0, %s157
  $region4: #{hybrid_attention.1} parent=0 // loop_header_branch
    %15 = sbr.rel (%p13) target = $region8
  $region5: #{hybrid_attention.1} parent=0 // loop_body
    %s17 = ssub.s32 %s12, 1
    %s18 = ssub.s32 %s12, 2
    %s19 = sadd.s32 %s12, 1
    %s20 = ssub.s32 %s12, %s19
    %p21 = scmp.eq.s32.totalorder %s20, 0
    %s23 = sadd.s32 %s22, 1
    %s24 = scalar_select %p21, %s22, %s23
    %p27 = pneg %p21
    %p28 = scmp.eq.s32.totalorder %s12, 1
    %p29 = por %p27, %p28
    %p30 = scmp.ne.s32.totalorder %s22, %s25
    %p31 = scmp.eq.s32.totalorder %s12, 0
    %p32 = por %p30, %p31
    %p33 = scmp.ne.s32.totalorder %s22, %s25
    %p34 = scmp.eq.s32.totalorder %s17, 1
    %p35 = por %p33, %p34
    %p36 = scmp.ne.s32.totalorder %s25, %s26
    %p37 = scmp.eq.s32.totalorder %s17, 0
    %p38 = por %p36, %p37
    %p39 = scmp.ne.s32.totalorder %s25, %s26
    %p40 = scmp.eq.s32.totalorder %s18, 1
    %p41 = por %p39, %p40
    %p43 = scmp.ne.s32.totalorder %s26, %s42
    %p44 = scmp.eq.s32.totalorder %s18, 0
    %p45 = por %p43, %p44
    %s47 = sadd.s32 %s46, 1
    %p50 = scmp.eq.s32.totalorder %s12, 1
    %p51 = scmp.ne.s32.totalorder %s46, %s48
    %p52 = scmp.eq.s32.totalorder %s12, 0
    %p53 = por %p51, %p52
    %p54 = scmp.ne.s32.totalorder %s46, %s48
    %p55 = scmp.eq.s32.totalorder %s17, 1
    %p56 = por %p54, %p55
    %p57 = scmp.ne.s32.totalorder %s48, %s49
    %p58 = scmp.eq.s32.totalorder %s17, 0
    %p59 = por %p57, %p58
    %p60 = scmp.ne.s32.totalorder %s48, %s49
    %p61 = scmp.eq.s32.totalorder %s18, 1
    %p62 = por %p60, %p61
    %p64 = scmp.ne.s32.totalorder %s49, %s63
    %p65 = scmp.eq.s32.totalorder %s18, 0
    %p66 = por %p64, %p65
    %s68 = sadd.s32 %s67, 1
    %p71 = scmp.eq.s32.totalorder %s12, 1
    %p72 = scmp.ne.s32.totalorder %s67, %s69
    %p73 = scmp.eq.s32.totalorder %s12, 0
    %p74 = por %p72, %p73
    %p75 = scmp.ne.s32.totalorder %s67, %s69
    %p76 = scmp.eq.s32.totalorder %s17, 1
    %p77 = por %p75, %p76
    %p78 = scmp.ne.s32.totalorder %s69, %s70
    %p79 = scmp.eq.s32.totalorder %s17, 0
    %p80 = por %p78, %p79
    %p81 = scmp.ne.s32.totalorder %s69, %s70
    %p82 = scmp.eq.s32.totalorder %s18, 1
    %p83 = por %p81, %p82
    %p85 = scmp.ne.s32.totalorder %s70, %s84
    %p86 = scmp.eq.s32.totalorder %s18, 0
    %p87 = por %p85, %p86
    %s89 = sadd.s32 %s88, 1
    %p92 = scmp.eq.s32.totalorder %s12, 1
    %p93 = scmp.ne.s32.totalorder %s88, %s90
    %p94 = scmp.eq.s32.totalorder %s12, 0
    %p95 = por %p93, %p94
    %p96 = scmp.ne.s32.totalorder %s88, %s90
    %p97 = scmp.eq.s32.totalorder %s17, 1
    %p98 = por %p96, %p97
    %p99 = scmp.ne.s32.totalorder %s90, %s91
    %p100 = scmp.eq.s32.totalorder %s17, 0
    %p101 = por %p99, %p100
    %p102 = scmp.ne.s32.totalorder %s90, %s91
    %p103 = scmp.eq.s32.totalorder %s18, 1
    %p104 = por %p102, %p103
    %p106 = scmp.ne.s32.totalorder %s91, %s105
    %p107 = scmp.eq.s32.totalorder %s18, 0
    %p108 = por %p106, %p107
    %s110 = sadd.s32 %s109, 1
    %p113 = scmp.eq.s32.totalorder %s12, 1
    %p114 = scmp.ne.s32.totalorder %s109, %s111
    %p115 = scmp.eq.s32.totalorder %s12, 0
    %p116 = por %p114, %p115
    %p117 = scmp.ne.s32.totalorder %s109, %s111
    %p118 = scmp.eq.s32.totalorder %s17, 1
    %p119 = por %p117, %p118
    %p120 = scmp.ne.s32.totalorder %s111, %s112
    %p121 = scmp.eq.s32.totalorder %s17, 0
    %p122 = por %p120, %p121
    %p123 = scmp.ne.s32.totalorder %s111, %s112
    %p124 = scmp.eq.s32.totalorder %s18, 1
    %p125 = por %p123, %p124
    %p127 = scmp.ne.s32.totalorder %s112, %s126
    %p128 = scmp.eq.s32.totalorder %s18, 0
    %p129 = por %p127, %p128
    %s131 = sadd.s32 %s130, 1
    %p134 = scmp.eq.s32.totalorder %s12, 1
    %p135 = scmp.ne.s32.totalorder %s130, %s132
    %p136 = scmp.eq.s32.totalorder %s12, 0
    %p137 = por %p135, %p136
    %p138 = scmp.ne.s32.totalorder %s130, %s132
    %p139 = scmp.eq.s32.totalorder %s17, 1
    %p140 = por %p138, %p139
    %p141 = scmp.ne.s32.totalorder %s132, %s133
    %p142 = scmp.eq.s32.totalorder %s17, 0
    %p143 = por %p141, %p142
    %p144 = scmp.ne.s32.totalorder %s132, %s133
    %p145 = scmp.eq.s32.totalorder %s18, 1
    %p146 = por %p144, %p145
    %p148 = scmp.ne.s32.totalorder %s133, %s147
    %p149 = scmp.eq.s32.totalorder %s18, 0
    %p150 = por %p148, %p149
    %s151 = ssub.s32 %s12, %s19
    %p152 = scmp.eq.s32.totalorder %s151, 0
    %s154 = sadd.s32 %s153, 1
    %s155 = scalar_select %p152, %s153, %s154
    %p158 = pneg %p152
    %p159 = scmp.eq.s32.totalorder %s12, 1
    %p160 = por %p158, %p159
    %p161 = scmp.ne.s32.totalorder %s153, %s156
    %p162 = scmp.eq.s32.totalorder %s12, 0
    %p163 = por %p161, %p162
    %p164 = scmp.ne.s32.totalorder %s153, %s156
    %p165 = scmp.eq.s32.totalorder %s17, 1
    %p166 = por %p164, %p165
    %p167 = scmp.ne.s32.totalorder %s156, %s157
    %p168 = scmp.eq.s32.totalorder %s17, 0
    %p169 = por %p167, %p168
    %p170 = scmp.ne.s32.totalorder %s156, %s157
    %p171 = scmp.eq.s32.totalorder %s18, 1
    %p172 = por %p170, %p171
    %p174 = scmp.ne.s32.totalorder %s157, %s173
    %p175 = scmp.eq.s32.totalorder %s18, 0
    %p176 = por %p174, %p175
    %p177 = scmp.le.s32.totalorder 1, %s12
    %p178 = scmp.lt.s32.totalorder %s12, 3
    %p179 = pnand %p177, %p178
    %p180 = pneg %p179
    // Predicated region
    $region9: #{hybrid_attention.1} parent=5 // pred_check
      _
    $region10: #{hybrid_attention.1} parent=5 // pred_check_branch
      %182 = sbr.rel (%p179) target = $region12
    $region11: #{hybrid_attention.1} parent=5 // pred_region
      %s183 = ssub.s32 %s12, 1
      // Predicated region
      $region13: #{hybrid_attention.1} parent=11 // pred_check
        %p184 = pneg %p59
      $region14: #{hybrid_attention.1} parent=11 // pred_check_branch
        %186 = sbr.rel (%p184) target = $region16
      $region15: #{hybrid_attention.1} parent=11 // pred_region
        _
      $region16: #{hybrid_attention.1} parent=11 // pred_fallthru
        _
      // Predicated region
      $region17: #{hybrid_attention.1} parent=11 // pred_check
        %p187 = pneg %p80
      $region18: #{hybrid_attention.1} parent=11 // pred_check_branch
        %189 = sbr.rel (%p187) target = $region20
      $region19: #{hybrid_attention.1} parent=11 // pred_region
        _
      $region20: #{hybrid_attention.1} parent=11 // pred_fallthru
        _
      // Predicated region
      $region21: #{hybrid_attention.1} parent=11 // pred_check
        %p190 = pneg %p101
      $region22: #{hybrid_attention.1} parent=11 // pred_check_branch
        %192 = sbr.rel (%p190) target = $region24
      $region23: #{hybrid_attention.1} parent=11 // pred_region
        _
      $region24: #{hybrid_attention.1} parent=11 // pred_fallthru
        _
      // Predicated region
      $region25: #{hybrid_attention.1} parent=11 // pred_check
        %p193 = pneg %p122
      $region26: #{hybrid_attention.1} parent=11 // pred_check_branch
        %195 = sbr.rel (%p193) target = $region28
      $region27: #{hybrid_attention.1} parent=11 // pred_region
        _
      $region28: #{hybrid_attention.1} parent=11 // pred_fallthru
        _
      // Predicated region
      $region29: #{hybrid_attention.1} parent=11 // pred_check
        %p196 = pneg %p143
      $region30: #{hybrid_attention.1} parent=11 // pred_check_branch
        %198 = sbr.rel (%p196) target = $region32
      $region31: #{hybrid_attention.1} parent=11 // pred_region
        _
      $region32: #{hybrid_attention.1} parent=11 // pred_fallthru
        _
    $region12: #{hybrid_attention.1} parent=5 // pred_fallthru
      _
    %p199 = scmp.lt.s32.totalorder %s12, 2
    // Predicated region
    $region33: #{hybrid_attention.1} parent=5 // pred_check
      %p200 = pneg %p199
    $region34: #{hybrid_attention.1} parent=5 // pred_check_branch
      %202 = sbr.rel (%p200) target = $region36
    $region35: #{hybrid_attention.1} parent=5 // pred_region
      // Predicated region
      $region37: #{hybrid_attention.1} parent=35 // pred_check
        %p203 = pneg %p32
      $region38: #{hybrid_attention.1} parent=35 // pred_check_branch
        %205 = sbr.rel (%p203) target = $region40
      $region39: #{hybrid_attention.1} parent=35 // pred_region
        %p206 = scmp.lt.s32.totalorder %s12, 1
        %s207 = scalar_select %p206, %s12, 1
        %s208 = smul.addr %s207, 8
        %s209 = smul.addr %s208, 8
        %s210 = scalar_lea.vmem %s0, %s209
      $region40: #{hybrid_attention.1} parent=35 // pred_fallthru
        _
    $region36: #{hybrid_attention.1} parent=5 // pred_fallthru
      _
    %p211 = scmp.le.s32.totalorder 1, %s12
    %p212 = scmp.lt.s32.totalorder %s12, 3
    %p213 = pnand %p211, %p212
    %p214 = pneg %p213
    // Predicated region
    $region41: #{hybrid_attention.1} parent=5 // pred_check
      _
    $region42: #{hybrid_attention.1} parent=5 // pred_check_branch
      %216 = sbr.rel (%p213) target = $region44
    $region43: #{hybrid_attention.1} parent=5 // pred_region
      %s217 = ssub.s32 %s12, 1
      %p218 = scmp.lt.s32.totalorder %s17, 1
      %s219 = scalar_select %p218, %s17, 1
      %s220 = smul.addr %s219, 8
      %s221 = smul.addr %s220, 8
      %s222 = scalar_lea.vmem %s0, %s221
      %p223 = pneg %p38
      %p224 = pneg %p35
      %p225 = pneg %p59
      %p226 = pneg %p56
      %p227 = pneg %p80
      %p228 = pneg %p77
      %p229 = pneg %p101
      %p230 = pneg %p98
      %p231 = pneg %p122
      %p232 = pneg %p119
      %p233 = pneg %p143
      %p234 = pneg %p140
      %p235 = pneg %p169
      %p236 = pneg %p166
      %p237 = scmp.lt.s32.totalorder %s17, 1
      %s238 = scalar_select %p237, %s17, 1
      %s239 = smul.addr %s238, 8
      %s240 = smul.addr %s239, 8
      %s241 = scalar_lea.vmem %s6, %s240
      %p242 = scmp.lt.s32.totalorder %s17, 1
      %s243 = scalar_select %p242, %s17, 1
      %s244 = smul.addr %s243, 8
      %s245 = smul.addr %s244, 8
      %s246 = scalar_lea.vmem %s0, %s245
      %p247 = scmp.lt.s32.totalorder %s17, 1
      %s248 = scalar_select %p247, %s17, 1
      %s249 = smul.addr %s248, 8
      %s250 = smul.addr %s249, 8
      %s251 = scalar_lea.vmem %s6, %s250
      %v252 = vld [vmem:[%s246] sm:$0xff]
      %v253 = vld [vmem:[%s246 + $0x8] sm:$0xff]
      %v254 = vld [vmem:[%s246 + $0x10] sm:$0xff]
      %v255 = vld [vmem:[%s246 + $0x18] sm:$0xff]
      %v256 = vld [vmem:[%s246 + $0x20] sm:$0xff]
      %v257 = vld [vmem:[%s246 + $0x28] sm:$0xff]
      %v258 = vld [vmem:[%s246 + $0x30] sm:$0xff]
      %v259 = vld [vmem:[%s246 + $0x38] sm:$0xff]
      %v260 = vadd.f32 %v252, %v253
      %261 = vadd.xlane.f32.xlu0 %v260
      %v262 = vpop.xlane.xlu0 %261
      %v263 = vadd.f32 %v254, %v255
      %264 = vadd.xlane.f32.xlu0 %v263
      %v265 = vpop.xlane.xlu0 %264
      %v266 = vadd.f32 %v256, %v257
      %267 = vadd.xlane.f32.xlu0 %v266
      %v268 = vpop.xlane.xlu0 %267
      %v269 = vadd.f32 %v258, %v259
      %270 = vadd.xlane.f32.xlu0 %v269
      %v271 = vpop.xlane.xlu0 %270
      %v272 = vrcp.pop 256.0
      %v273 = vmul.f32 %v262, %v272
      %v274 = vmul.f32 %v265, %v272
      %v275 = vmul.f32 %v268, %v272
      %v276 = vmul.f32 %v271, %v272
      %v277 = vmax.f32 %v252, %v253
      %278 = vmax.xlane.f32.xlu0 %v277
      %v279 = vpop.xlane.xlu0 %278
      %v280 = vmax.f32 %v254, %v255
      %281 = vmax.xlane.f32.xlu0 %v280
      %v282 = vpop.xlane.xlu0 %281
      %v283 = vmax.f32 %v256, %v257
      %284 = vmax.xlane.f32.xlu0 %v283
      %v285 = vpop.xlane.xlu0 %284
      %v286 = vmax.f32 %v258, %v259
      %287 = vmax.xlane.f32.xlu0 %v286
      %v288 = vpop.xlane.xlu0 %287
      %v289 = vld [vmem:[%s1] sm:$0xf]
      %v290 = vld [vmem:[%s2] sm:$0xff]
      %v291 = vld [vmem:[%s2 + $0x8] sm:$0xff]
      %v292 = vld [vmem:[%s2 + $0x10] sm:$0xff]
      %v293 = vld [vmem:[%s2 + $0x18] sm:$0xff]
      %vm294 = vcmask 261120
      %v296 = vsel %vm294, %v289, 0
      %298 = vmatprep.subr.mxu0 0.0
      %299 = vmatpush1.msra.mxu0 %v273
      %300 = vmatprep.subr.mxu0 0.0
      %301 = vmatpush1.msra.mxu0 %v274
      %302 = vmatprep.subr.mxu0 0.0
      %303 = vmatpush1.msra.mxu0 %v275
      %304 = vmatprep.subr.mxu0 0.0
      %305 = vmatpush1.msra.mxu0 %v276
      %306 = vmatprep.subr.mxu0 0.0
      %307 = vmatpush1.msra.mxu0 0.0
      %308 = vmatprep.subr.mxu0 0.0
      %309 = vmatpush1.msra.mxu0 0.0
      %310 = vmatprep.subr.mxu0 0.0
      %311 = vmatpush1.msra.mxu0 0.0
      %312 = vmatprep.subr.mxu0 0.0
      %313 = vmatpush1.msra.mxu0 0.0
      %314 = vmatprep.subr.mxu0 0.0
      %315 = vmatpush1.msra.mxu0 0.0
      %316 = vmatprep.subr.mxu0 0.0
      %317 = vmatpush1.msra.mxu0 0.0
      %318 = vmatprep.subr.mxu0 0.0
      %319 = vmatpush1.msra.mxu0 0.0
      %320 = vmatprep.subr.mxu0 0.0
      %321 = vmatpush1.msra.mxu0 0.0
      %322 = vmatprep.subr.mxu0 0.0
      %323 = vmatpush1.msra.mxu0 0.0
      %324 = vmatprep.subr.mxu0 0.0
      %325 = vmatpush1.msra.mxu0 0.0
      %326 = vmatprep.subr.mxu0 0.0
      %327 = vmatpush1.msra.mxu0 0.0
      %328 = vmatprep.subr.mxu0 0.0
      %329 = vmatpush1.msra.mxu0 0.0
      %330 = vmatprep.subr.mxu0 0.0
      %331 = vmatpush1.msra.mxu0 0.0
      %332 = vmatprep.subr.mxu0 0.0
      %333 = vmatpush1.msra.mxu0 0.0
      %334 = vmatprep.subr.mxu0 0.0
      %335 = vmatpush1.msra.mxu0 0.0
      %336 = vmatprep.subr.mxu0 0.0
      %337 = vmatpush1.msra.mxu0 0.0
      %338 = vmatprep.subr.mxu0 0.0
      %339 = vmatpush1.msra.mxu0 0.0
      %340 = vmatprep.subr.mxu0 0.0
      %341 = vmatpush1.msra.mxu0 0.0
      %342 = vmatprep.subr.mxu0 0.0
      %343 = vmatpush1.msra.mxu0 0.0
      %344 = vmatprep.subr.mxu0 0.0
      %345 = vmatpush1.msra.mxu0 0.0
      %346 = vmatprep.subr.mxu0 0.0
      %347 = vmatpush1.msra.mxu0 0.0
      %348 = vmatprep.subr.mxu0 0.0
      %349 = vmatpush1.msra.mxu0 0.0
      %350 = vmatprep.subr.mxu0 0.0
      %351 = vmatpush1.msra.mxu0 0.0
      %352 = vmatprep.subr.mxu0 0.0
      %353 = vmatpush1.msra.mxu0 0.0
      %354 = vmatprep.subr.mxu0 0.0
      %355 = vmatpush1.msra.mxu0 0.0
      %356 = vmatprep.subr.mxu0 0.0
      %357 = vmatpush1.msra.mxu0 0.0
      %358 = vmatprep.subr.mxu0 0.0
      %359 = vmatpush1.msra.mxu0 0.0
      %360 = vmatprep.subr.mxu0 0.0
      %361 = vmatpush1.msra.mxu0 0.0
      %362 = vmatprep.mubr.f32.mxu0 0.0
      %363 = vmatmul.mubr.f32.gmra.mrb[0].mxu0 %v296
      %v364 = vpop.f32.mrb[0].mxu0
      %v365 = vadd.f32 0.0, %v364
      %v366 = vpop.f32.mrb[0].mxu0
      %367 = vdwg.mxu0
      %v368 = vmax.f32 %v365, 0.0
      %369 = vmatprep.subr.mxu0 0.0
      %370 = vmatpush1.msra.mxu0 %v279
      %371 = vmatprep.subr.mxu0 0.0
      %372 = vmatpush1.msra.mxu0 %v282
      %373 = vmatprep.subr.mxu0 0.0
      %374 = vmatpush1.msra.mxu0 %v285
      %375 = vmatprep.subr.mxu0 0.0
      %376 = vmatpush1.msra.mxu0 %v288
      %377 = vmatprep.subr.mxu0 0.0
      %378 = vmatpush1.msra.mxu0 0.0
      %379 = vmatprep.subr.mxu0 0.0
      %380 = vmatpush1.msra.mxu0 0.0
      %381 = vmatprep.subr.mxu0 0.0
      %382 = vmatpush1.msra.mxu0 0.0
      %383 = vmatprep.subr.mxu0 0.0
      %384 = vmatpush1.msra.mxu0 0.0
      %385 = vmatprep.subr.mxu0 0.0
      %386 = vmatpush1.msra.mxu0 0.0
      %387 = vmatprep.subr.mxu0 0.0
      %388 = vmatpush1.msra.mxu0 0.0
      %389 = vmatprep.subr.mxu0 0.0
      %390 = vmatpush1.msra.mxu0 0.0
      %391 = vmatprep.subr.mxu0 0.0
      %392 = vmatpush1.msra.mxu0 0.0
      %393 = vmatprep.subr.mxu0 0.0
      %394 = vmatpush1.msra.mxu0 0.0
      %395 = vmatprep.subr.mxu0 0.0
      %396 = vmatpush1.msra.mxu0 0.0
      %397 = vmatprep.subr.mxu0 0.0
      %398 = vmatpush1.msra.mxu0 0.0
      %399 = vmatprep.subr.mxu0 0.0
      %400 = vmatpush1.msra.mxu0 0.0
      %401 = vmatprep.subr.mxu0 0.0
      %402 = vmatpush1.msra.mxu0 0.0
      %403 = vmatprep.subr.mxu0 0.0
      %404 = vmatpush1.msra.mxu0 0.0
      %405 = vmatprep.subr.mxu0 0.0
      %406 = vmatpush1.msra.mxu0 0.0
      %407 = vmatprep.subr.mxu0 0.0
      %408 = vmatpush1.msra.mxu0 0.0
      %409 = vmatprep.subr.mxu0 0.0
      %410 = vmatpush1.msra.mxu0 0.0
      %411 = vmatprep.subr.mxu0 0.0
      %412 = vmatpush1.msra.mxu0 0.0
      %413 = vmatprep.subr.mxu0 0.0
      %414 = vmatpush1.msra.mxu0 0.0
      %415 = vmatprep.subr.mxu0 0.0
      %416 = vmatpush1.msra.mxu0 0.0
      %417 = vmatprep.subr.mxu0 0.0
      %418 = vmatpush1.msra.mxu0 0.0
      %419 = vmatprep.subr.mxu0 0.0
      %420 = vmatpush1.msra.mxu0 0.0
      %421 = vmatprep.subr.mxu0 0.0
      %422 = vmatpush1.msra.mxu0 0.0
      %423 = vmatprep.subr.mxu0 0.0
      %424 = vmatpush1.msra.mxu0 0.0
      %425 = vmatprep.subr.mxu0 0.0
      %426 = vmatpush1.msra.mxu0 0.0
      %427 = vmatprep.subr.mxu0 0.0
      %428 = vmatpush1.msra.mxu0 0.0
      %429 = vmatprep.subr.mxu0 0.0
      %430 = vmatpush1.msra.mxu0 0.0
      %431 = vmatprep.subr.mxu0 0.0
      %432 = vmatpush1.msra.mxu0 0.0
      %433 = vmatprep.mubr.f32.mxu0 0.0
      %434 = vmatmul.mubr.f32.gmra.mrb[0].mxu0 %v296
      %v435 = vpop.f32.mrb[0].mxu0
      %v436 = vadd.f32 0.0, %v435
      %v437 = vpop.f32.mrb[0].mxu0
      %438 = vdwg.mxu0
      %v439 = vmax.f32 %v436, 0.0
      %vm440 = vcmask 31744
      %v442 = vsel %vm440, %v290, 0
      %v445 = vsel %vm440, %v291, 0
      %v448 = vsel %vm440, %v292, 0
      %v451 = vsel %vm440, %v293, 0
      %vm453 = vcmask 1043456
      %v455 = vsel %vm453, %v439, 0
      %457 = vmatprep.subr.mxu0 0.0
      %458 = vmatpush1.msra.mxu0 %v455
      %459 = vmatprep.subr.mxu0 0.0
      %460 = vmatpush1.msra.mxu0 0.0
      %461 = vmatprep.subr.mxu0 0.0
      %462 = vmatpush1.msra.mxu0 0.0
      %463 = vmatprep.subr.mxu0 0.0
      %464 = vmatpush1.msra.mxu0 0.0
      %465 = vmatprep.subr.mxu0 0.0
      %466 = vmatpush1.msra.mxu0 0.0
      %467 = vmatprep.subr.mxu0 0.0
      %468 = vmatpush1.msra.mxu0 0.0
      %469 = vmatprep.subr.mxu0 0.0
      %470 = vmatpush1.msra.mxu0 0.0
      %471 = vmatprep.subr.mxu0 0.0
      %472 = vmatpush1.msra.mxu0 0.0
      %473 = vmatprep.subr.mxu0 0.0
      %474 = vmatpush1.msra.mxu0 0.0
      %475 = vmatprep.subr.mxu0 0.0
      %476 = vmatpush1.msra.mxu0 0.0
      %477 = vmatprep.subr.mxu0 0.0
      %478 = vmatpush1.msra.mxu0 0.0
      %479 = vmatprep.subr.mxu0 0.0
      %480 = vmatpush1.msra.mxu0 0.0
      %481 = vmatprep.subr.mxu0 0.0
      %482 = vmatpush1.msra.mxu0 0.0
      %483 = vmatprep.subr.mxu0 0.0
      %484 = vmatpush1.msra.mxu0 0.0
      %485 = vmatprep.subr.mxu0 0.0
      %486 = vmatpush1.msra.mxu0 0.0
      %487 = vmatprep.subr.mxu0 0.0
      %488 = vmatpush1.msra.mxu0 0.0
      %489 = vmatprep.subr.mxu0 0.0
      %490 = vmatpush1.msra.mxu0 0.0
      %491 = vmatprep.subr.mxu0 0.0
      %492 = vmatpush1.msra.mxu0 0.0
      %493 = vmatprep.subr.mxu0 0.0
      %494 = vmatpush1.msra.mxu0 0.0
      %495 = vmatprep.subr.mxu0 0.0
      %496 = vmatpush1.msra.mxu0 0.0
      %497 = vmatprep.subr.mxu0 0.0
      %498 = vmatpush1.msra.mxu0 0.0
      %499 = vmatprep.subr.mxu0 0.0
      %500 = vmatpush1.msra.mxu0 0.0
      %501 = vmatprep.subr.mxu0 0.0
      %502 = vmatpush1.msra.mxu0 0.0
      %503 = vmatprep.subr.mxu0 0.0
      %504 = vmatpush1.msra.mxu0 0.0
      %505 = vmatprep.subr.mxu0 0.0
      %506 = vmatpush1.msra.mxu0 0.0
      %507 = vmatprep.subr.mxu0 0.0
      %508 = vmatpush1.msra.mxu0 0.0
      %509 = vmatprep.subr.mxu0 0.0
      %510 = vmatpush1.msra.mxu0 0.0
      %511 = vmatprep.subr.mxu0 0.0
      %512 = vmatpush1.msra.mxu0 0.0
      %513 = vmatprep.subr.mxu0 0.0
      %514 = vmatpush1.msra.mxu0 0.0
      %515 = vmatprep.subr.mxu0 0.0
      %516 = vmatpush1.msra.mxu0 0.0
      %517 = vmatprep.subr.mxu0 0.0
      %518 = vmatpush1.msra.mxu0 0.0
      %519 = vmatprep.subr.mxu0 0.0
      %520 = vmatpush1.msra.mxu0 0.0
      %521 = vmatprep.mubr.f32.mxu0 0.0
      %522 = vmatmul.mubr.f32.gmra.mrb[0].mxu0 %v442
      %v523 = vpop.f32.mrb[0].mxu0
      %v524 = vadd.f32 0.0, %v523
      %v525 = vpop.f32.mrb[0].mxu0
      %526 = vmatprep.mubr.f32.mxu0 0.0
      %527 = vmatmul.mubr.f32.gmra.mrb[0].mxu0 %v445
      %v528 = vpop.f32.mrb[0].mxu0
      %v529 = vadd.f32 0.0, %v528
      %v530 = vpop.f32.mrb[0].mxu0
      %531 = vmatprep.mubr.f32.mxu0 0.0
      %532 = vmatmul.mubr.f32.gmra.mrb[0].mxu0 %v448
      %v533 = vpop.f32.mrb[0].mxu0
      %v534 = vadd.f32 0.0, %v533
      %v535 = vpop.f32.mrb[0].mxu0
      %536 = vmatprep.mubr.f32.mxu0 0.0
      %537 = vmatmul.mubr.f32.gmra.mrb[0].mxu0 %v451
      %v538 = vpop.f32.mrb[0].mxu0
      %v539 = vadd.f32 0.0, %v538
      %v540 = vpop.f32.mrb[0].mxu0
      %541 = vdwg.mxu0
      %v543 = vsel %vm453, %v368, 0
      %545 = vmatprep.subr.mxu0 0.0
      %546 = vmatpush1.msra.mxu0 %v543
      %547 = vmatprep.subr.mxu0 0.0
      %548 = vmatpush1.msra.mxu0 0.0
      %549 = vmatprep.subr.mxu0 0.0
      %550 = vmatpush1.msra.mxu0 0.0
      %551 = vmatprep.subr.mxu0 0.0
      %552 = vmatpush1.msra.mxu0 0.0
      %553 = vmatprep.subr.mxu0 0.0
      %554 = vmatpush1.msra.mxu0 0.0
      %555 = vmatprep.subr.mxu0 0.0
      %556 = vmatpush1.msra.mxu0 0.0
      %557 = vmatprep.subr.mxu0 0.0
      %558 = vmatpush1.msra.mxu0 0.0
      %559 = vmatprep.subr.mxu0 0.0
      %560 = vmatpush1.msra.mxu0 0.0
      %561 = vmatprep.subr.mxu0 0.0
      %562 = vmatpush1.msra.mxu0 0.0
      %563 = vmatprep.subr.mxu0 0.0
      %564 = vmatpush1.msra.mxu0 0.0
      %565 = vmatprep.subr.mxu0 0.0
      %566 = vmatpush1.msra.mxu0 0.0
      %567 = vmatprep.subr.mxu0 0.0
      %568 = vmatpush1.msra.mxu0 0.0
      %569 = vmatprep.subr.mxu0 0.0
      %570 = vmatpush1.msra.mxu0 0.0
      %571 = vmatprep.subr.mxu0 0.0
      %572 = vmatpush1.msra.mxu0 0.0
      %573 = vmatprep.subr.mxu0 0.0
      %574 = vmatpush1.msra.mxu0 0.0
      %575 = vmatprep.subr.mxu0 0.0
      %576 = vmatpush1.msra.mxu0 0.0
      %577 = vmatprep.subr.mxu0 0.0
      %578 = vmatpush1.msra.mxu0 0.0
      %579 = vmatprep.subr.mxu0 0.0
      %580 = vmatpush1.msra.mxu0 0.0
      %581 = vmatprep.subr.mxu0 0.0
      %582 = vmatpush1.msra.mxu0 0.0
      %583 = vmatprep.subr.mxu0 0.0
      %584 = vmatpush1.msra.mxu0 0.0
      %585 = vmatprep.subr.mxu0 0.0
      %586 = vmatpush1.msra.mxu0 0.0
      %587 = vmatprep.subr.mxu0 0.0
      %588 = vmatpush1.msra.mxu0 0.0
      %589 = vmatprep.subr.mxu0 0.0
      %590 = vmatpush1.msra.mxu0 0.0
      %591 = vmatprep.subr.mxu0 0.0
      %592 = vmatpush1.msra.mxu0 0.0
      %593 = vmatprep.subr.mxu0 0.0
      %594 = vmatpush1.msra.mxu0 0.0
      %595 = vmatprep.subr.mxu0 0.0
      %596 = vmatpush1.msra.mxu0 0.0
      %597 = vmatprep.subr.mxu0 0.0
      %598 = vmatpush1.msra.mxu0 0.0
      %599 = vmatprep.subr.mxu0 0.0
      %600 = vmatpush1.msra.mxu0 0.0
      %601 = vmatprep.subr.mxu0 0.0
      %602 = vmatpush1.msra.mxu0 0.0
      %603 = vmatprep.subr.mxu0 0.0
      %604 = vmatpush1.msra.mxu0 0.0
      %605 = vmatprep.subr.mxu0 0.0
      %606 = vmatpush1.msra.mxu0 0.0
      %607 = vmatprep.subr.mxu0 0.0
      %608 = vmatpush1.msra.mxu0 0.0
      %609 = vmatprep.mubr.f32.mxu0 0.0
      %610 = vmatmul.mubr.f32.gmra.mrb[0].mxu0 %v442
      %v611 = vpop.f32.mrb[0].mxu0
      %v612 = vadd.f32 %v524, %v611
      %v613 = vpop.f32.mrb[0].mxu0
      %614 = vmatprep.mubr.f32.mxu0 0.0
      %615 = vmatmul.mubr.f32.gmra.mrb[0].mxu0 %v445
      %v616 = vpop.f32.mrb[0].mxu0
      %v617 = vadd.f32 %v529, %v616
      %v618 = vpop.f32.mrb[0].mxu0
      %619 = vmatprep.mubr.f32.mxu0 0.0
      %620 = vmatmul.mubr.f32.gmra.mrb[0].mxu0 %v448
      %v621 = vpop.f32.mrb[0].mxu0
      %v622 = vadd.f32 %v534, %v621
      %v623 = vpop.f32.mrb[0].mxu0
      %624 = vmatprep.mubr.f32.mxu0 0.0
      %625 = vmatmul.mubr.f32.gmra.mrb[0].mxu0 %v451
      %v626 = vpop.f32.mrb[0].mxu0
      %v627 = vadd.f32 %v539, %v626
      %v628 = vpop.f32.mrb[0].mxu0
      %629 = vdwg.mxu0
      %v630 = vsub.f32 0.0, %v612
      %v631 = vsub.f32 0.0, %v617
      %v632 = vsub.f32 0.0, %v622
      %v633 = vsub.f32 0.0, %v627
      %v634 = vmul.f32 %v630, 1.442695
      %v635 = vpow.pop %v634
      %v636 = vmul.f32 %v631, 1.442695
      %v637 = vpow.pop %v636
      %v638 = vmul.f32 %v632, 1.442695
      %v639 = vpow.pop %v638
      %v640 = vmul.f32 %v633, 1.442695
      %v641 = vpow.pop %v640
      %v642 = vadd.f32 %v635, 1.0
      %v643 = vadd.f32 %v637, 1.0
      %v644 = vadd.f32 %v639, 1.0
      %v645 = vadd.f32 %v641, 1.0
      %v646 = vrcp.pop %v642
      %v647 = vmul.f32 1.0, %v646
      %v648 = vrcp.pop %v643
      %v649 = vmul.f32 1.0, %v648
      %v650 = vrcp.pop %v644
      %v651 = vmul.f32 1.0, %v650
      %v652 = vrcp.pop %v645
      %v653 = vmul.f32 1.0, %v652
      %655 = vset.pattern.permute.xlu0 0
      %656 = vperm.xlu0 %655, %v647
      %v657 = vpop.permute.xlu0 %656
      %660 = vset.pattern.permute.xlu0 0
      %661 = vperm.xlu0 %660, %v649
      %v662 = vpop.permute.xlu0 %661
      %665 = vset.pattern.permute.xlu0 0
      %666 = vperm.xlu0 %665, %v651
      %v667 = vpop.permute.xlu0 %666
      %670 = vset.pattern.permute.xlu0 0
      %671 = vperm.xlu0 %670, %v653
      %v672 = vpop.permute.xlu0 %671
      %v674 = vmul.f32 %v252, %v657
      %v675 = vmul.f32 %v253, %v657
      %v676 = vmul.f32 %v254, %v662
      %v677 = vmul.f32 %v255, %v662
      %v678 = vmul.f32 %v256, %v667
      %v679 = vmul.f32 %v257, %v667
      %v680 = vmul.f32 %v258, %v672
      %v681 = vmul.f32 %v259, %v672
      %v682 = vadd.f32 %v674, %v676
      %v683 = vadd.f32 %v682, %v678
      %v684 = vadd.f32 %v683, %v680
      %v685 = vrot.slane %v684, 4
      %v686 = vadd.f32 %v684, %v685
      %v687 = vrot.slane %v686, 2
      %v688 = vadd.f32 %v686, %v687
      %v689 = vrot.slane %v688, 1
      %v690 = vadd.f32 %v688, %v689
      %v691 = vadd.f32 %v675, %v677
      %v692 = vadd.f32 %v691, %v679
      %v693 = vadd.f32 %v692, %v681
      %v694 = vrot.slane %v693, 4
      %v695 = vadd.f32 %v693, %v694
      %v696 = vrot.slane %v695, 2
      %v697 = vadd.f32 %v695, %v696
      %v698 = vrot.slane %v697, 1
      %v699 = vadd.f32 %v697, %v698
      %v700 = vrcp.pop 32.0
      %v701 = vmul.f32 %v690, %v700
      %v702 = vmul.f32 %v699, %v700
      %v703 = vmax.f32 %v674, %v678
      %v704 = vmax.f32 %v676, %v680
      %v705 = vmax.f32 %v703, %v704
      %v706 = vrot.slane %v705, 4
      %v707 = vmax.f32 %v705, %v706
      %v708 = vrot.slane %v707, 2
      %v709 = vmax.f32 %v707, %v708
      %v710 = vrot.slane %v709, 1
      %v711 = vmax.f32 %v709, %v710
      %v712 = vmax.f32 %v675, %v679
      %v713 = vmax.f32 %v677, %v681
      %v714 = vmax.f32 %v712, %v713
      %v715 = vrot.slane %v714, 4
      %v716 = vmax.f32 %v714, %v715
      %v717 = vrot.slane %v716, 2
      %v718 = vmax.f32 %v716, %v717
      %v719 = vrot.slane %v718, 1
      %v720 = vmax.f32 %v718, %v719
      %vm721 = vcmask 1041408
      %vm722 = vcmask 1043458
      %vm723 = vmor %vm722, %vm721
      %vm724 = vcmask 439300
      %vm725 = vmor %vm724, %vm723
      %726 = vst.msk [vmem:[#allocation2] sm:$0x3f] %vm725, 0.0
      %v729 = vcombine.low %v701, %v702
      %v731 = vunpack.c.l.s4 1966171168
      %v732 = vunpack.c.0.s8 %v731
      %v733 = vlaneseq
      %v734 = vshrl.u32 %v733, 7
      %v735 = vsub.s32 %v732, %v734
      %v736 = vrot.slane %v729, %v735
      %v738 = vunpack.c.l.s4 1966171168
      %v739 = vunpack.c.0.s8 %v738
      %v740 = vlaneseq
      %v741 = vshrl.u32 %v740, 7
      %v742 = vsub.s32 %v739, %v741
      %v743 = vrot.slane %v736, %v742
      %744 = vrot.lane.b32.xlu0 %v743, 27
      %v745 = vpop.permute.xlu0 %744
      %v746 = vrot.slane %v745, 7
      %vm747 = vcmask 220160
      %v748 = vsel %vm747, %v746, %v745
      %v750 = vlaneseq
      %vm751 = vcmp.ge.s32.totalorder %v750, 27
      %vm752 = vcmp.lt.s32.totalorder %v750, 283
      %vm753 = vmand %vm751, %vm752
      %754 = vst.msk [vmem:[#allocation2] ss:$2 sm:$0x7] %vm753, %v748
      %v757 = vcombine.low %v711, %v720
      %v759 = vunpack.c.l.s4 1966171168
      %v760 = vunpack.c.0.s8 %v759
      %v761 = vlaneseq
      %v762 = vshrl.u32 %v761, 7
      %v763 = vsub.s32 %v760, %v762
      %v764 = vrot.slane %v757, %v763
      %v766 = vunpack.c.l.s4 1966171168
      %v767 = vunpack.c.0.s8 %v766
      %v768 = vlaneseq
      %v769 = vshrl.u32 %v768, 7
      %v770 = vsub.s32 %v767, %v769
      %v771 = vrot.slane %v764, %v770
      %772 = vrot.lane.b32.xlu0 %v771, 27
      %v773 = vpop.permute.xlu0 %772
      %v774 = vrot.slane %v773, 7
      %v775 = vsel %vm747, %v774, %v773
      %s777 = scalar_lea.vmem [#allocation2], 1
      %778 = vst.msk [vmem:[%s777] ss:$2 sm:$0x7] %vm753, %v775
      %v779 = vld [vmem:[%s5] sm:$0xf]
      %v780 = vld [vmem:[#allocation2] sm:$0xf]
      %v781 = vmul.f32 %v779, %v780
      %v782 = vadd.f32 %v781, 0.0
      %s783 = scalar_lea.vmem %s5, 4
      %v784 = vld [vmem:[%s783] sm:$0xf]
      %v785 = vld [vmem:[#allocation2] sm:$0x3f]
      %787 = vrot.lane.b32.xlu0 %v785, 127
      %v788 = vpop.permute.xlu0 %787
      %v789 = vrot.slane %v788, 2
      %vm790 = vcmask 1039360
      %v791 = vsel %vm790, %v788, %v789
      %v793 = vmul.f32 %v784, %v791
      %v794 = vadd.f32 %v782, %v793
      %s795 = scalar_lea.vmem %s5, 8
      %v796 = vld [vmem:[%s795] sm:$0xf]
      %797 = vrot.lane.b32.xlu0 %v785, 126
      %v798 = vpop.permute.xlu0 %797
      %v799 = vrot.slane %v798, 2
      %vm800 = vcmask 1031168
      %v801 = vsel %vm800, %v798, %v799
      %v803 = vmul.f32 %v796, %v801
      %v804 = vadd.f32 %v794, %v803
      %s805 = scalar_lea.vmem %s5, 12
      %v806 = vld [vmem:[%s805] sm:$0xf]
      %807 = vrot.lane.b32.xlu0 %v785, 125
      %v808 = vpop.permute.xlu0 %807
      %v809 = vrot.slane %v808, 2
      %vm810 = vcmask 1022976
      %v811 = vsel %vm810, %v808, %v809
      %v813 = vmul.f32 %v806, %v811
      %v814 = vadd.f32 %v804, %v813
      %s815 = scalar_lea.vmem %s5, 16
      %v816 = vld [vmem:[%s815] sm:$0xf]
      %817 = vrot.lane.b32.xlu0 %v785, 124
      %v818 = vpop.permute.xlu0 %817
      %v819 = vrot.slane %v818, 2
      %vm820 = vcmask 1014784
      %v821 = vsel %vm820, %v818, %v819
      %v823 = vmul.f32 %v816, %v821
      %v824 = vadd.f32 %v814, %v823
      %s825 = scalar_lea.vmem %s5, 20
      %v826 = vld [vmem:[%s825] sm:$0xf]
      %827 = vrot.lane.b32.xlu0 %v785, 123
      %v828 = vpop.permute.xlu0 %827
      %v829 = vrot.slane %v828, 2
      %vm830 = vcmask 1006592
      %v831 = vsel %vm830, %v828, %v829
      %v833 = vmul.f32 %v826, %v831
      %v834 = vadd.f32 %v824, %v833
      %s835 = scalar_lea.vmem %s5, 24
      %v836 = vld [vmem:[%s835] sm:$0xf]
      %837 = vrot.lane.b32.xlu0 %v785, 122
      %v838 = vpop.permute.xlu0 %837
      %v839 = vrot.slane %v838, 2
      %vm840 = vcmask 998400
      %v841 = vsel %vm840, %v838, %v839
      %v843 = vmul.f32 %v836, %v841
      %v844 = vadd.f32 %v834, %v843
      %s845 = scalar_lea.vmem %s5, 28
      %v846 = vld [vmem:[%s845] sm:$0xf]
      %847 = vrot.lane.b32.xlu0 %v785, 120
      %v848 = vpop.permute.xlu0 %847
      %v849 = vrot.slane %v848, 2
      %vm850 = vcmask 982016
      %v851 = vsel %vm850, %v848, %v849
      %v853 = vmul.f32 %v846, %v851
      %v854 = vadd.f32 %v844, %v853
      %s855 = scalar_lea.vmem %s5, 32
      %v856 = vld [vmem:[%s855] sm:$0xf]
      %857 = vrot.lane.b32.xlu0 %v785, 119
      %v858 = vpop.permute.xlu0 %857
      %v859 = vrot.slane %v858, 2
      %vm860 = vcmask 973824
      %v861 = vsel %vm860, %v858, %v859
      %v863 = vmul.f32 %v856, %v861
      %v864 = vadd.f32 %v854, %v863
      %s865 = scalar_lea.vmem %s5, 36
      %v866 = vld [vmem:[%s865] sm:$0xf]
      %867 = vrot.lane.b32.xlu0 %v785, 118
      %v868 = vpop.permute.xlu0 %867
      %v869 = vrot.slane %v868, 2
      %vm870 = vcmask 965632
      %v871 = vsel %vm870, %v868, %v869
      %v873 = vmul.f32 %v866, %v871
      %v874 = vadd.f32 %v864, %v873
      %s875 = scalar_lea.vmem %s5, 40
      %v876 = vld [vmem:[%s875] sm:$0xf]
      %877 = vrot.lane.b32.xlu0 %v785, 117
      %v878 = vpop.permute.xlu0 %877
      %v879 = vrot.slane %v878, 2
      %vm880 = vcmask 957440
      %v881 = vsel %vm880, %v878, %v879
      %v883 = vmul.f32 %v876, %v881
      %v884 = vadd.f32 %v874, %v883
      %s885 = scalar_lea.vmem %s5, 44
      %v886 = vld [vmem:[%s885] sm:$0xf]
      %887 = vrot.lane.b32.xlu0 %v785, 116
      %v888 = vpop.permute.xlu0 %887
      %v889 = vrot.slane %v888, 2
      %vm890 = vcmask 949248
      %v891 = vsel %vm890, %v888, %v889
      %v893 = vmul.f32 %v886, %v891
      %v894 = vadd.f32 %v884, %v893
      %s895 = scalar_lea.vmem %s5, 48
      %v896 = vld [vmem:[%s895] sm:$0xf]
      %897 = vrot.lane.b32.xlu0 %v785, 115
      %v898 = vpop.permute.xlu0 %897
      %v899 = vrot.slane %v898, 2
      %vm900 = vcmask 941056
      %v901 = vsel %vm900, %v898, %v899
      %v903 = vmul.f32 %v896, %v901
      %v904 = vadd.f32 %v894, %v903
      %s905 = scalar_lea.vmem %s5, 52
      %v906 = vld [vmem:[%s905] sm:$0xf]
      %907 = vrot.lane.b32.xlu0 %v785, 114
      %v908 = vpop.permute.xlu0 %907
      %v909 = vrot.slane %v908, 2
      %vm910 = vcmask 932864
      %v911 = vsel %vm910, %v908, %v909
      %v913 = vmul.f32 %v906, %v911
      %v914 = vadd.f32 %v904, %v913
      %s915 = scalar_lea.vmem %s5, 56
      %v916 = vld [vmem:[%s915] sm:$0xf]
      %917 = vrot.lane.b32.xlu0 %v785, 112
      %v918 = vpop.permute.xlu0 %917
      %v919 = vrot.slane %v918, 2
      %vm920 = vcmask 916480
      %v921 = vsel %vm920, %v918, %v919
      %v923 = vmul.f32 %v916, %v921
      %v924 = vadd.f32 %v914, %v923
      %s925 = scalar_lea.vmem %s5, 60
      %v926 = vld [vmem:[%s925] sm:$0xf]
      %927 = vrot.lane.b32.xlu0 %v785, 111
      %v928 = vpop.permute.xlu0 %927
      %v929 = vrot.slane %v928, 2
      %vm930 = vcmask 908288
      %v931 = vsel %vm930, %v928, %v929
      %v933 = vmul.f32 %v926, %v931
      %v934 = vadd.f32 %v924, %v933
      %s935 = scalar_lea.vmem %s5, 64
      %v936 = vld [vmem:[%s935] sm:$0xf]
      %937 = vrot.lane.b32.xlu0 %v785, 110
      %v938 = vpop.permute.xlu0 %937
      %v939 = vrot.slane %v938, 2
      %vm940 = vcmask 900096
      %v941 = vsel %vm940, %v938, %v939
      %v943 = vmul.f32 %v936, %v941
      %v944 = vadd.f32 %v934, %v943
      %s945 = scalar_lea.vmem %s5, 68
      %v946 = vld [vmem:[%s945] sm:$0xf]
      %947 = vrot.lane.b32.xlu0 %v785, 109
      %v948 = vpop.permute.xlu0 %947
      %v949 = vrot.slane %v948, 2
      %vm950 = vcmask 891904
      %v951 = vsel %vm950, %v948, %v949
      %v953 = vmul.f32 %v946, %v951
      %v954 = vadd.f32 %v944, %v953
      %s955 = scalar_lea.vmem %s5, 72
      %v956 = vld [vmem:[%s955] sm:$0xf]
      %957 = vrot.lane.b32.xlu0 %v785, 108
      %v958 = vpop.permute.xlu0 %957
      %v959 = vrot.slane %v958, 2
      %vm960 = vcmask 883712
      %v961 = vsel %vm960, %v958, %v959
      %v963 = vmul.f32 %v956, %v961
      %v964 = vadd.f32 %v954, %v963
      %s965 = scalar_lea.vmem %s5, 76
      %v966 = vld [vmem:[%s965] sm:$0xf]
      %967 = vrot.lane.b32.xlu0 %v785, 107
      %v968 = vpop.permute.xlu0 %967
      %v969 = vrot.slane %v968, 2
      %vm970 = vcmask 875520
      %v971 = vsel %vm970, %v968, %v969
      %v973 = vmul.f32 %v966, %v971
      %v974 = vadd.f32 %v964, %v973
      %s975 = scalar_lea.vmem %s5, 80
      %v976 = vld [vmem:[%s975] sm:$0xf]
      %977 = vrot.lane.b32.xlu0 %v785, 106
      %v978 = vpop.permute.xlu0 %977
      %v979 = vrot.slane %v978, 2
      %vm980 = vcmask 867328
      %v981 = vsel %vm980, %v978, %v979
      %v983 = vmul.f32 %v976, %v981
      %v984 = vadd.f32 %v974, %v983
      %s985 = scalar_lea.vmem %s5, 84
      %v986 = vld [vmem:[%s985] sm:$0xf]
      %987 = vrot.lane.b32.xlu0 %v785, 104
      %v988 = vpop.permute.xlu0 %987
      %v989 = vrot.slane %v988, 2
      %vm990 = vcmask 850944
      %v991 = vsel %vm990, %v988, %v989
      %v993 = vmul.f32 %v986, %v991
      %v994 = vadd.f32 %v984, %v993
      %s995 = scalar_lea.vmem %s5, 88
      %v996 = vld [vmem:[%s995] sm:$0xf]
      %997 = vrot.lane.b32.xlu0 %v785, 103
      %v998 = vpop.permute.xlu0 %997
      %v999 = vrot.slane %v998, 2
      %vm1000 = vcmask 842752
      %v1001 = vsel %vm1000, %v998, %v999
      %v1003 = vmul.f32 %v996, %v1001
      %v1004 = vadd.f32 %v994, %v1003
      %s1005 = scalar_lea.vmem %s5, 92
      %v1006 = vld [vmem:[%s1005] sm:$0xf]
      %1007 = vrot.lane.b32.xlu0 %v785, 102
      %v1008 = vpop.permute.xlu0 %1007
      %v1009 = vrot.slane %v1008, 2
      %vm1010 = vcmask 834560
      %v1011 = vsel %vm1010, %v1008, %v1009
      %v1013 = vmul.f32 %v1006, %v1011
      %v1014 = vadd.f32 %v1004, %v1013
      %s1015 = scalar_lea.vmem %s5, 96
      %v1016 = vld [vmem:[%s1015] sm:$0xf]
      %1017 = vrot.lane.b32.xlu0 %v785, 101
      %v1018 = vpop.permute.xlu0 %1017
      %v1019 = vrot.slane %v1018, 2
      %vm1020 = vcmask 826368
      %v1021 = vsel %vm1020, %v1018, %v1019
      %v1023 = vmul.f32 %v1016, %v1021
      %v1024 = vadd.f32 %v1014, %v1023
      %s1025 = scalar_lea.vmem %s5, 100
      %v1026 = vld [vmem:[%s1025] sm:$0xf]
      %1027 = vrot.lane.b32.xlu0 %v785, 100
      %v1028 = vpop.permute.xlu0 %1027
      %v1029 = vrot.slane %v1028, 2
      %vm1030 = vcmask 818176
      %v1031 = vsel %vm1030, %v1028, %v1029
      %v1033 = vmul.f32 %v1026, %v1031
      %v1034 = vadd.f32 %v1024, %v1033
      %s1035 = scalar_lea.vmem %s5, 104
      %v1036 = vld [vmem:[%s1035] sm:$0xf]
      %1037 = vrot.lane.b32.xlu0 %v785, 99
      %v1038 = vpop.permute.xlu0 %1037
      %v1039 = vrot.slane %v1038, 2
      %vm1040 = vcmask 809984
      %v1041 = vsel %vm1040, %v1038, %v1039
      %v1043 = vmul.f32 %v1036, %v1041
      %v1044 = vadd.f32 %v1034, %v1043
      %s1045 = scalar_lea.vmem %s5, 108
      %v1046 = vld [vmem:[%s1045] sm:$0xf]
      %1047 = vrot.lane.b32.xlu0 %v785, 98
      %v1048 = vpop.permute.xlu0 %1047
      %v1049 = vrot.slane %v1048, 2
      %vm1050 = vcmask 801792
      %v1051 = vsel %vm1050, %v1048, %v1049
      %v1053 = vmul.f32 %v1046, %v1051
      %v1054 = vadd.f32 %v1044, %v1053
      %s1055 = scalar_lea.vmem %s5, 112
      %v1056 = vld [vmem:[%s1055] sm:$0xf]
      %1057 = vrot.lane.b32.xlu0 %v785, 96
      %v1058 = vpop.permute.xlu0 %1057
      %v1059 = vrot.slane %v1058, 2
      %vm1060 = vcmask 785408
      %v1061 = vsel %vm1060, %v1058, %v1059
      %v1063 = vmul.f32 %v1056, %v1061
      %v1064 = vadd.f32 %v1054, %v1063
      %s1065 = scalar_lea.vmem %s5, 116
      %v1066 = vld [vmem:[%s1065] sm:$0xf]
      %1067 = vrot.lane.b32.xlu0 %v785, 95
      %v1068 = vpop.permute.xlu0 %1067
      %v1069 = vrot.slane %v1068, 2
      %vm1070 = vcmask 777216
      %v1071 = vsel %vm1070, %v1068, %v1069
      %v1073 = vmul.f32 %v1066, %v1071
      %v1074 = vadd.f32 %v1064, %v1073
      %s1075 = scalar_lea.vmem %s5, 120
      %v1076 = vld [vmem:[%s1075] sm:$0xf]
      %1077 = vrot.lane.b32.xlu0 %v785, 94
      %v1078 = vpop.permute.xlu0 %1077
      %v1079 = vrot.slane %v1078, 2
      %vm1080 = vcmask 769024
      %v1081 = vsel %vm1080, %v1078, %v1079
      %v1083 = vmul.f32 %v1076, %v1081
      %v1084 = vadd.f32 %v1074, %v1083
      %s1085 = scalar_lea.vmem %s5, 124
      %v1086 = vld [vmem:[%s1085] sm:$0xf]
      %1087 = vrot.lane.b32.xlu0 %v785, 93
      %v1088 = vpop.permute.xlu0 %1087
      %v1089 = vrot.slane %v1088, 2
      %vm1090 = vcmask 760832
      %v1091 = vsel %vm1090, %v1088, %v1089
      %v1093 = vmul.f32 %v1086, %v1091
      %v1094 = vadd.f32 %v1084, %v1093
      %s1095 = scalar_lea.vmem %s5, 128
      %v1096 = vld [vmem:[%s1095] sm:$0xf]
      %1097 = vrot.lane.b32.xlu0 %v785, 92
      %v1098 = vpop.permute.xlu0 %1097
      %v1099 = vrot.slane %v1098, 2
      %vm1100 = vcmask 752640
      %v1101 = vsel %vm1100, %v1098, %v1099
      %v1103 = vmul.f32 %v1096, %v1101
      %v1104 = vadd.f32 %v1094, %v1103
      %s1105 = scalar_lea.vmem %s5, 132
      %v1106 = vld [vmem:[%s1105] sm:$0xf]
      %1107 = vrot.lane.b32.xlu0 %v785, 91
      %v1108 = vpop.permute.xlu0 %1107
      %v1109 = vrot.slane %v1108, 2
      %vm1110 = vcmask 744448
      %v1111 = vsel %vm1110, %v1108, %v1109
      %v1113 = vmul.f32 %v1106, %v1111
      %v1114 = vadd.f32 %v1104, %v1113
      %s1115 = scalar_lea.vmem %s5, 136
      %v1116 = vld [vmem:[%s1115] sm:$0xf]
      %1117 = vrot.lane.b32.xlu0 %v785, 90
      %v1118 = vpop.permute.xlu0 %1117
      %v1119 = vrot.slane %v1118, 2
      %vm1120 = vcmask 736256
      %v1121 = vsel %vm1120, %v1118, %v1119
      %v1123 = vmul.f32 %v1116, %v1121
      %v1124 = vadd.f32 %v1114, %v1123
      %s1125 = scalar_lea.vmem %s5, 140
      %v1126 = vld [vmem:[%s1125] sm:$0xf]
      %1127 = vrot.lane.b32.xlu0 %v785, 88
      %v1128 = vpop.permute.xlu0 %1127
      %v1129 = vrot.slane %v1128, 2
      %vm1130 = vcmask 719872
      %v1131 = vsel %vm1130, %v1128, %v1129
      %v1133 = vmul.f32 %v1126, %v1131
      %v1134 = vadd.f32 %v1124, %v1133
      %s1135 = scalar_lea.vmem %s5, 144
      %v1136 = vld [vmem:[%s1135] sm:$0xf]
      %1137 = vrot.lane.b32.xlu0 %v785, 87
      %v1138 = vpop.permute.xlu0 %1137
      %v1139 = vrot.slane %v1138, 2
      %vm1140 = vcmask 711680
      %v1141 = vsel %vm1140, %v1138, %v1139
      %v1143 = vmul.f32 %v1136, %v1141
      %v1144 = vadd.f32 %v1134, %v1143
      %s1145 = scalar_lea.vmem %s5, 148
      %v1146 = vld [vmem:[%s1145] sm:$0xf]
      %1147 = vrot.lane.b32.xlu0 %v785, 86
      %v1148 = vpop.permute.xlu0 %1147
      %v1149 = vrot.slane %v1148, 2
      %vm1150 = vcmask 703488
      %v1151 = vsel %vm1150, %v1148, %v1149
      %v1153 = vmul.f32 %v1146, %v1151
      %v1154 = vadd.f32 %v1144, %v1153
      %s1155 = scalar_lea.vmem %s5, 152
      %v1156 = vld [vmem:[%s1155] sm:$0xf]
      %1157 = vrot.lane.b32.xlu0 %v785, 85
      %v1158 = vpop.permute.xlu0 %1157
      %v1159 = vrot.slane %v1158, 2
      %vm1160 = vcmask 695296
      %v1161 = vsel %vm1160, %v1158, %v1159
      %v1163 = vmul.f32 %v1156, %v1161
      %v1164 = vadd.f32 %v1154, %v1163
      %s1165 = scalar_lea.vmem %s5, 156
      %v1166 = vld [vmem:[%s1165] sm:$0xf]
      %1167 = vrot.lane.b32.xlu0 %v785, 84
      %v1168 = vpop.permute.xlu0 %1167
      %v1169 = vrot.slane %v1168, 2
      %vm1170 = vcmask 687104
      %v1171 = vsel %vm1170, %v1168, %v1169
      %v1173 = vmul.f32 %v1166, %v1171
      %v1174 = vadd.f32 %v1164, %v1173
      %s1175 = scalar_lea.vmem %s5, 160
      %v1176 = vld [vmem:[%s1175] sm:$0xf]
      %1177 = vrot.lane.b32.xlu0 %v785, 83
      %v1178 = vpop.permute.xlu0 %1177
      %v1179 = vrot.slane %v1178, 2
      %vm1180 = vcmask 678912
      %v1181 = vsel %vm1180, %v1178, %v1179
      %v1183 = vmul.f32 %v1176, %v1181
      %v1184 = vadd.f32 %v1174, %v1183
      %s1185 = scalar_lea.vmem %s5, 164
      %v1186 = vld [vmem:[%s1185] sm:$0xf]
      %1187 = vrot.lane.b32.xlu0 %v785, 82
      %v1188 = vpop.permute.xlu0 %1187
      %v1189 = vrot.slane %v1188, 2
      %vm1190 = vcmask 670720
      %v1191 = vsel %vm1190, %v1188, %v1189
      %v1193 = vmul.f32 %v1186, %v1191
      %v1194 = vadd.f32 %v1184, %v1193
      %s1195 = scalar_lea.vmem %s5, 168
      %v1196 = vld [vmem:[%s1195] sm:$0xf]
      %1197 = vrot.lane.b32.xlu0 %v785, 80
      %v1198 = vpop.permute.xlu0 %1197
      %v1199 = vrot.slane %v1198, 2
      %vm1200 = vcmask 654336
      %v1201 = vsel %vm1200, %v1198, %v1199
      %v1203 = vmul.f32 %v1196, %v1201
      %v1204 = vadd.f32 %v1194, %v1203
      %s1205 = scalar_lea.vmem %s5, 172
      %v1206 = vld [vmem:[%s1205] sm:$0xf]
      %1207 = vrot.lane.b32.xlu0 %v785, 79
      %v1208 = vpop.permute.xlu0 %1207
      %v1209 = vrot.slane %v1208, 2
      %vm1210 = vcmask 646144
      %v1211 = vsel %vm1210, %v1208, %v1209
      %v1213 = vmul.f32 %v1206, %v1211
      %v1214 = vadd.f32 %v1204, %v1213
      %s1215 = scalar_lea.vmem %s5, 176
      %v1216 = vld [vmem:[%s1215] sm:$0xf]
      %1217 = vrot.lane.b32.xlu0 %v785, 78
      %v1218 = vpop.permute.xlu0 %1217
      %v1219 = vrot.slane %v1218, 2
      %vm1220 = vcmask 637952
      %v1221 = vsel %vm1220, %v1218, %v1219
      %v1223 = vmul.f32 %v1216, %v1221
      %v1224 = vadd.f32 %v1214, %v1223
      %s1225 = scalar_lea.vmem %s5, 180
      %v1226 = vld [vmem:[%s1225] sm:$0xf]
      %1227 = vrot.lane.b32.xlu0 %v785, 77
      %v1228 = vpop.permute.xlu0 %1227
      %v1229 = vrot.slane %v1228, 2
      %vm1230 = vcmask 629760
      %v1231 = vsel %vm1230, %v1228, %v1229
      %v1233 = vmul.f32 %v1226, %v1231
      %v1234 = vadd.f32 %v1224, %v1233
      %s1235 = scalar_lea.vmem %s5, 184
      %v1236 = vld [vmem:[%s1235] sm:$0xf]
      %1237 = vrot.lane.b32.xlu0 %v785, 76
      %v1238 = vpop.permute.xlu0 %1237
      %v1239 = vrot.slane %v1238, 2
      %vm1240 = vcmask 621568
      %v1241 = vsel %vm1240, %v1238, %v1239
      %v1243 = vmul.f32 %v1236, %v1241
      %v1244 = vadd.f32 %v1234, %v1243
      %s1245 = scalar_lea.vmem %s5, 188
      %v1246 = vld [vmem:[%s1245] sm:$0xf]
      %1247 = vrot.lane.b32.xlu0 %v785, 75
      %v1248 = vpop.permute.xlu0 %1247
      %v1249 = vrot.slane %v1248, 2
      %vm1250 = vcmask 613376
      %v1251 = vsel %vm1250, %v1248, %v1249
      %v1253 = vmul.f32 %v1246, %v1251
      %v1254 = vadd.f32 %v1244, %v1253
      %s1255 = scalar_lea.vmem %s5, 192
      %v1256 = vld [vmem:[%s1255] sm:$0xf]
      %1257 = vrot.lane.b32.xlu0 %v785, 74
      %v1258 = vpop.permute.xlu0 %1257
      %v1259 = vrot.slane %v1258, 2
      %vm1260 = vcmask 605184
      %v1261 = vsel %vm1260, %v1258, %v1259
      %v1263 = vmul.f32 %v1256, %v1261
      %v1264 = vadd.f32 %v1254, %v1263
      %v1267 = vunpack.c.l.s4 1983009808
      %v1268 = vunpack.c.0.s8 %v1267
      %v1269 = vlaneseq
      %v1270 = vshrl.u32 %v1269, 7
      %v1271 = vsub.s32 %v1268, %v1270
      %v1272 = vrot.slane %v1264, %v1271
      %v1273 = vcombine.high %v1272, %v1272
      %v1276 = vsel %vm721, %v1272, 0.0
      %v1277 = vrot.slane %v1276, 4
      %v1278 = vadd.f32 %v1276, %v1277
      %v1279 = vrot.slane %v1278, 2
      %v1280 = vadd.f32 %v1278, %v1279
      %v1281 = vrot.slane %v1280, 1
      %v1282 = vadd.f32 %v1280, %v1281
      %v1283 = vsel %vm721, %v1273, 0.0
      %v1284 = vrot.slane %v1283, 4
      %v1285 = vadd.f32 %v1283, %v1284
      %v1286 = vrot.slane %v1285, 2
      %v1287 = vadd.f32 %v1285, %v1286
      %v1288 = vrot.slane %v1287, 1
      %v1289 = vadd.f32 %v1287, %v1288
      %v1290 = vsub.f32 0.0, %v1282
      %v1291 = vsub.f32 0.0, %v1289
      %v1292 = vmul.f32 %v1290, 1.442695
      %v1293 = vpow.pop %v1292
      %v1294 = vmul.f32 %v1291, 1.442695
      %v1295 = vpow.pop %v1294
      %v1296 = vadd.f32 %v1293, 1.0
      %v1297 = vadd.f32 %v1295, 1.0
      %v1298 = vrcp.pop %v1296
      %v1299 = vmul.f32 1.0, %v1298
      %v1300 = vrcp.pop %v1297
      %v1301 = vmul.f32 1.0, %v1300
      %v1302 = vmul.f32 %v674, %v1299
      %v1303 = vmul.f32 %v675, %v1301
      %v1304 = vmul.f32 %v676, %v1299
      %v1305 = vmul.f32 %v677, %v1301
      %v1306 = vmul.f32 %v678, %v1299
      %v1307 = vmul.f32 %v679, %v1301
      %v1308 = vmul.f32 %v680, %v1299
      %v1309 = vmul.f32 %v681, %v1301
      %v1310 = vadd.f32 %v1302, %v1303
      %1311 = vadd.xlane.f32.xlu0 %v1310
      %v1312 = vpop.xlane.xlu0 %1311
      %v1313 = vadd.f32 %v1304, %v1305
      %1314 = vadd.xlane.f32.xlu0 %v1313
      %v1315 = vpop.xlane.xlu0 %1314
      %v1316 = vadd.f32 %v1306, %v1307
      %1317 = vadd.xlane.f32.xlu0 %v1316
      %v1318 = vpop.xlane.xlu0 %1317
      %v1319 = vadd.f32 %v1308, %v1309
      %1320 = vadd.xlane.f32.xlu0 %v1319
      %v1321 = vpop.xlane.xlu0 %1320
      %v1322 = vmul.f32 %v1312, %v272
      %v1323 = vmul.f32 %v1315, %v272
      %v1324 = vmul.f32 %v1318, %v272
      %v1325 = vmul.f32 %v1321, %v272
      %v1326 = vld [vmem:[%s3] sm:$0xf]
      %v1327 = vld [vmem:[%s4] sm:$0xff]
      %v1328 = vld [vmem:[%s4 + $0x8] sm:$0xff]
      %v1329 = vld [vmem:[%s4 + $0x10] sm:$0xff]
      %v1330 = vld [vmem:[%s4 + $0x18] sm:$0xff]
      %v1332 = vsel %vm294, %v1326, 0
      %1334 = vmatprep.subr.mxu0 0.0
      %1335 = vmatpush1.msra.mxu0 %v1322
      %1336 = vmatprep.subr.mxu0 0.0
      %1337 = vmatpush1.msra.mxu0 %v1323
      %1338 = vmatprep.subr.mxu0 0.0
      %1339 = vmatpush1.msra.mxu0 %v1324
      %1340 = vmatprep.subr.mxu0 0.0
      %1341 = vmatpush1.msra.mxu0 %v1325
      %1342 = vmatprep.subr.mxu0 0.0
      %1343 = vmatpush1.msra.mxu0 0.0
      %1344 = vmatprep.subr.mxu0 0.0
      %1345 = vmatpush1.msra.mxu0 0.0
      %1346 = vmatprep.subr.mxu0 0.0
      %1347 = vmatpush1.msra.mxu0 0.0
      %1348 = vmatprep.subr.mxu0 0.0
      %1349 = vmatpush1.msra.mxu0 0.0
      %1350 = vmatprep.subr.mxu0 0.0
      %1351 = vmatpush1.msra.mxu0 0.0
      %1352 = vmatprep.subr.mxu0 0.0
      %1353 = vmatpush1.msra.mxu0 0.0
      %1354 = vmatprep.subr.mxu0 0.0
      %1355 = vmatpush1.msra.mxu0 0.0
      %1356 = vmatprep.subr.mxu0 0.0
      %1357 = vmatpush1.msra.mxu0 0.0
      %1358 = vmatprep.subr.mxu0 0.0
      %1359 = vmatpush1.msra.mxu0 0.0
      %1360 = vmatprep.subr.mxu0 0.0
      %1361 = vmatpush1.msra.mxu0 0.0
      %1362 = vmatprep.subr.mxu0 0.0
      %1363 = vmatpush1.msra.mxu0 0.0
      %1364 = vmatprep.subr.mxu0 0.0
      %1365 = vmatpush1.msra.mxu0 0.0
      %1366 = vmatprep.subr.mxu0 0.0
      %1367 = vmatpush1.msra.mxu0 0.0
      %1368 = vmatprep.subr.mxu0 0.0
      %1369 = vmatpush1.msra.mxu0 0.0
      %1370 = vmatprep.subr.mxu0 0.0
      %1371 = vmatpush1.msra.mxu0 0.0
      %1372 = vmatprep.subr.mxu0 0.0
      %1373 = vmatpush1.msra.mxu0 0.0
      %1374 = vmatprep.subr.mxu0 0.0
      %1375 = vmatpush1.msra.mxu0 0.0
      %1376 = vmatprep.subr.mxu0 0.0
      %1377 = vmatpush1.msra.mxu0 0.0
      %1378 = vmatprep.subr.mxu0 0.0
      %1379 = vmatpush1.msra.mxu0 0.0
      %1380 = vmatprep.subr.mxu0 0.0
      %1381 = vmatpush1.msra.mxu0 0.0
      %1382 = vmatprep.subr.mxu0 0.0
      %1383 = vmatpush1.msra.mxu0 0.0
      %1384 = vmatprep.subr.mxu0 0.0
      %1385 = vmatpush1.msra.mxu0 0.0
      %1386 = vmatprep.subr.mxu0 0.0
      %1387 = vmatpush1.msra.mxu0 0.0
      %1388 = vmatprep.subr.mxu0 0.0
      %1389 = vmatpush1.msra.mxu0 0.0
      %1390 = vmatprep.subr.mxu0 0.0
      %1391 = vmatpush1.msra.mxu0 0.0
      %1392 = vmatprep.subr.mxu0 0.0
      %1393 = vmatpush1.msra.mxu0 0.0
      %1394 = vmatprep.subr.mxu0 0.0
      %1395 = vmatpush1.msra.mxu0 0.0
      %1396 = vmatprep.subr.mxu0 0.0
      %1397 = vmatpush1.msra.mxu0 0.0
      %1398 = vmatprep.mubr.f32.mxu0 0.0
      %1399 = vmatmul.mubr.f32.gmra.mrb[0].mxu0 %v1332
      %v1400 = vpop.f32.mrb[0].mxu0
      %v1401 = vadd.f32 0.0, %v1400
      %v1402 = vpop.f32.mrb[0].mxu0
      %1403 = vdwg.mxu0
      %v1404 = vmax.f32 %v1401, 0.0
      %v1406 = vsel %vm440, %v1327, 0
      %v1409 = vsel %vm440, %v1328, 0
      %v1412 = vsel %vm440, %v1329, 0
      %v1415 = vsel %vm440, %v1330, 0
      %v1418 = vsel %vm453, %v1404, 0
      %1420 = vmatprep.subr.mxu0 0.0
      %1421 = vmatpush1.msra.mxu0 %v1418
      %1422 = vmatprep.subr.mxu0 0.0
      %1423 = vmatpush1.msra.mxu0 0.0
      %1424 = vmatprep.subr.mxu0 0.0
      %1425 = vmatpush1.msra.mxu0 0.0
      %1426 = vmatprep.subr.mxu0 0.0
      %1427 = vmatpush1.msra.mxu0 0.0
      %1428 = vmatprep.subr.mxu0 0.0
      %1429 = vmatpush1.msra.mxu0 0.0
      %1430 = vmatprep.subr.mxu0 0.0
      %1431 = vmatpush1.msra.mxu0 0.0
      %1432 = vmatprep.subr.mxu0 0.0
      %1433 = vmatpush1.msra.mxu0 0.0
      %1434 = vmatprep.subr.mxu0 0.0
      %1435 = vmatpush1.msra.mxu0 0.0
      %1436 = vmatprep.subr.mxu0 0.0
      %1437 = vmatpush1.msra.mxu0 0.0
      %1438 = vmatprep.subr.mxu0 0.0
      %1439 = vmatpush1.msra.mxu0 0.0
      %1440 = vmatprep.subr.mxu0 0.0
      %1441 = vmatpush1.msra.mxu0 0.0
      %1442 = vmatprep.subr.mxu0 0.0
      %1443 = vmatpush1.msra.mxu0 0.0
      %1444 = vmatprep.subr.mxu0 0.0
      %1445 = vmatpush1.msra.mxu0 0.0
      %1446 = vmatprep.subr.mxu0 0.0
      %1447 = vmatpush1.msra.mxu0 0.0
      %1448 = vmatprep.subr.mxu0 0.0
      %1449 = vmatpush1.msra.mxu0 0.0
      %1450 = vmatprep.subr.mxu0 0.0
      %1451 = vmatpush1.msra.mxu0 0.0
      %1452 = vmatprep.subr.mxu0 0.0
      %1453 = vmatpush1.msra.mxu0 0.0
      %1454 = vmatprep.subr.mxu0 0.0
      %1455 = vmatpush1.msra.mxu0 0.0
      %1456 = vmatprep.subr.mxu0 0.0
      %1457 = vmatpush1.msra.mxu0 0.0
      %1458 = vmatprep.subr.mxu0 0.0
      %1459 = vmatpush1.msra.mxu0 0.0
      %1460 = vmatprep.subr.mxu0 0.0
      %1461 = vmatpush1.msra.mxu0 0.0
      %1462 = vmatprep.subr.mxu0 0.0
      %1463 = vmatpush1.msra.mxu0 0.0
      %1464 = vmatprep.subr.mxu0 0.0
      %1465 = vmatpush1.msra.mxu0 0.0
      %1466 = vmatprep.subr.mxu0 0.0
      %1467 = vmatpush1.msra.mxu0 0.0
      %1468 = vmatprep.subr.mxu0 0.0
      %1469 = vmatpush1.msra.mxu0 0.0
      %1470 = vmatprep.subr.mxu0 0.0
      %1471 = vmatpush1.msra.mxu0 0.0
      %1472 = vmatprep.subr.mxu0 0.0
      %1473 = vmatpush1.msra.mxu0 0.0
      %1474 = vmatprep.subr.mxu0 0.0
      %1475 = vmatpush1.msra.mxu0 0.0
      %1476 = vmatprep.subr.mxu0 0.0
      %1477 = vmatpush1.msra.mxu0 0.0
      %1478 = vmatprep.subr.mxu0 0.0
      %1479 = vmatpush1.msra.mxu0 0.0
      %1480 = vmatprep.subr.mxu0 0.0
      %1481 = vmatpush1.msra.mxu0 0.0
      %1482 = vmatprep.subr.mxu0 0.0
      %1483 = vmatpush1.msra.mxu0 0.0
      %1484 = vmatprep.mubr.f32.mxu0 0.0
      %1485 = vmatmul.mubr.f32.gmra.mrb[0].mxu0 %v1406
      %v1486 = vpop.f32.mrb[0].mxu0
      %v1487 = vadd.f32 0.0, %v1486
      %v1488 = vpop.f32.mrb[0].mxu0
      %1489 = vmatprep.mubr.f32.mxu0 0.0
      %1490 = vmatmul.mubr.f32.gmra.mrb[0].mxu0 %v1409
      %v1491 = vpop.f32.mrb[0].mxu0
      %v1492 = vadd.f32 0.0, %v1491
      %v1493 = vpop.f32.mrb[0].mxu0
      %1494 = vmatprep.mubr.f32.mxu0 0.0
      %1495 = vmatmul.mubr.f32.gmra.mrb[0].mxu0 %v1412
      %v1496 = vpop.f32.mrb[0].mxu0
      %v1497 = vadd.f32 0.0, %v1496
      %v1498 = vpop.f32.mrb[0].mxu0
      %1499 = vmatprep.mubr.f32.mxu0 0.0
      %1500 = vmatmul.mubr.f32.gmra.mrb[0].mxu0 %v1415
      %v1501 = vpop.f32.mrb[0].mxu0
      %v1502 = vadd.f32 0.0, %v1501
      %v1503 = vpop.f32.mrb[0].mxu0
      %1504 = vdwg.mxu0
      %v1505 = vsub.f32 0.0, %v1487
      %v1506 = vsub.f32 0.0, %v1492
      %v1507 = vsub.f32 0.0, %v1497
      %v1508 = vsub.f32 0.0, %v1502
      %v1509 = vmul.f32 %v1505, 1.442695
      %v1510 = vpow.pop %v1509
      %v1511 = vmul.f32 %v1506, 1.442695
      %v1512 = vpow.pop %v1511
      %v1513 = vmul.f32 %v1507, 1.442695
      %v1514 = vpow.pop %v1513
      %v1515 = vmul.f32 %v1508, 1.442695
      %v1516 = vpow.pop %v1515
      %v1517 = vadd.f32 %v1510, 1.0
      %v1518 = vadd.f32 %v1512, 1.0
      %v1519 = vadd.f32 %v1514, 1.0
      %v1520 = vadd.f32 %v1516, 1.0
      %v1521 = vrcp.pop %v1517
      %v1522 = vmul.f32 1.0, %v1521
      %v1523 = vrcp.pop %v1518
      %v1524 = vmul.f32 1.0, %v1523
      %v1525 = vrcp.pop %v1519
      %v1526 = vmul.f32 1.0, %v1525
      %v1527 = vrcp.pop %v1520
      %v1528 = vmul.f32 1.0, %v1527
      %1530 = vset.pattern.permute.xlu0 0
      %1531 = vperm.xlu0 %1530, %v1522
      %v1532 = vpop.permute.xlu0 %1531
      %1535 = vset.pattern.permute.xlu0 0
      %1536 = vperm.xlu0 %1535, %v1524
      %v1537 = vpop.permute.xlu0 %1536
      %1540 = vset.pattern.permute.xlu0 0
      %1541 = vperm.xlu0 %1540, %v1526
      %v1542 = vpop.permute.xlu0 %1541
      %1545 = vset.pattern.permute.xlu0 0
      %1546 = vperm.xlu0 %1545, %v1528
      %v1547 = vpop.permute.xlu0 %1546
      %v1549 = vmul.f32 %v1302, %v1532
      %v1550 = vmul.f32 %v1303, %v1532
      %v1551 = vmul.f32 %v1304, %v1537
      %v1552 = vmul.f32 %v1305, %v1537
      %v1553 = vmul.f32 %v1306, %v1542
      %v1554 = vmul.f32 %v1307, %v1542
      %v1555 = vmul.f32 %v1308, %v1547
      %v1556 = vmul.f32 %v1309, %v1547
      %1557 = vst [vmem:[%s251] sm:$0xff] %v1549
      %1558 = vst [vmem:[%s251 + $0x8] sm:$0xff] %v1550
      %1559 = vst [vmem:[%s251 + $0x10] sm:$0xff] %v1551
      %1560 = vst [vmem:[%s251 + $0x18] sm:$0xff] %v1552
      %1561 = vst [vmem:[%s251 + $0x20] sm:$0xff] %v1553
      %1562 = vst [vmem:[%s251 + $0x28] sm:$0xff] %v1554
      %1563 = vst [vmem:[%s251 + $0x30] sm:$0xff] %v1555
      %1564 = vst [vmem:[%s251 + $0x38] sm:$0xff] %v1556
      %p1565 = scmp.lt.s32.totalorder %s17, 1
      %s1566 = scalar_select %p1565, %s17, 1
      %s1567 = smul.addr %s1566, 8
      %s1568 = smul.addr %s1567, 8
      %s1569 = scalar_lea.vmem %s6, %s1568
      // Predicated region
      $region45: #{hybrid_attention.1} parent=43 // pred_check
        %p1570 = pneg %p166
      $region46: #{hybrid_attention.1} parent=43 // pred_check_branch
        %1572 = sbr.rel (%p1570) target = $region48
      $region47: #{hybrid_attention.1} parent=43 // pred_region
        _
      $region48: #{hybrid_attention.1} parent=43 // pred_fallthru
        _
    $region44: #{hybrid_attention.1} parent=5 // pred_fallthru
      _
    %p1573 = scmp.le.s32.totalorder 2, %s12
    // Predicated region
    $region49: #{hybrid_attention.1} parent=5 // pred_check
      %p1574 = pneg %p1573
    $region50: #{hybrid_attention.1} parent=5 // pred_check_branch
      %1576 = sbr.rel (%p1574) target = $region52
    $region51: #{hybrid_attention.1} parent=5 // pred_region
      %s1577 = ssub.s32 %s12, 2
      // Predicated region
      $region53: #{hybrid_attention.1} parent=51 // pred_check
        %p1578 = pneg %p172
      $region54: #{hybrid_attention.1} parent=51 // pred_check_branch
        %1580 = sbr.rel (%p1578) target = $region56
      $region55: #{hybrid_attention.1} parent=51 // pred_region
        %p1581 = scmp.lt.s32.totalorder %s18, 1
        %s1582 = scalar_select %p1581, %s18, 1
        %s1583 = smul.addr %s1582, 8
        %s1584 = smul.addr %s1583, 8
        %s1585 = scalar_lea.vmem %s6, %s1584
      $region56: #{hybrid_attention.1} parent=51 // pred_fallthru
        _
    $region52: #{hybrid_attention.1} parent=5 // pred_fallthru
      _
  $region6: #{hybrid_attention.1} parent=0 // loop_footer
    %s16 = sadd.s32 1, %s12
  $region7: #{hybrid_attention.1} parent=0 // loop_footer_branch
    %11 = sbr.rel target = $region3
  $region8: #{hybrid_attention.1} parent=0 // loop_exit
    _

</llo_original>
